<compile_context>
chip_gen: v5e
topology: v5e:2x2
jax: 0.10.0
libtpu: 0.0.40
codegen_flags: <defaults>
</compile_context>

<pallas_src>
import functools

import jax
import jax.numpy as jnp
from jax.experimental import pallas as pl
from jax.experimental.pallas import tpu as pltpu


# Destination-row tile.  256 keeps the (TILE_M, N_pad) int8 adj tile plus the
# resident bf16 operands comfortably inside v7x's 64 MiB VMEM with double
# buffering; v5e/v6e (128 MiB physical) could raise this to 512 for large N.
TILE_M = 256

_COMPILER_PARAMS = pltpu.CompilerParams(
    dimension_semantics=("arbitrary",),        # scratch init at program_id==0
    vmem_limit_bytes=48 * 1024 * 1024,         # > 16/32 MiB scoped defaults, < 64 MiB v7x
)


# ---------------------------------------------------------------------------
# Pallas kernels
# ---------------------------------------------------------------------------
def _layer1_kernel(adj_ref, xs_ref, w1_ref, b1_ref, w2_ref, dinv_ref,
                   g1_ref, xw1_ref):
    """Fused GCN layer 1 + layer-2 feature transform for one dst-row tile.

    Writes g1 = dinv * (relu(dinv * (S @ xw1) + b1) @ W2) as lane-dense bf16
    [TILE_M, 128], where xw1 = (dinv*x) @ W1 is computed once into VMEM scratch.
    """
    @pl.when(pl.program_id(0) == 0)
    def _():
        xw1_ref[...] = jnp.dot(
            xs_ref[...], w1_ref[...], preferred_element_type=jnp.float32
        ).astype(xw1_ref.dtype)

    # S is exact 0/1 int8 streamed from HBM; cast to bf16 for the MXU.
    agg = jnp.dot(adj_ref[...].astype(jnp.bfloat16), xw1_ref[...],
                  preferred_element_type=jnp.float32)
    h1 = jnp.maximum(dinv_ref[...] * agg + b1_ref[...], 0.0)        # [TILE_M, 64]
    g1 = jnp.dot(h1.astype(jnp.bfloat16), w2_ref[...],
                 preferred_element_type=jnp.float32)
    g1_ref[...] = (dinv_ref[...] * g1).astype(g1_ref.dtype)         # [TILE_M, 128]


def _layer2_kernel(adj_ref, g1_ref, b2_ref, dinv_ref, pool_ref, wfc_ref, bfc_ref,
                   out_ref, acc_ref):
    """GCN layer 2 tile + fused global mean pool; fc + log_softmax in the epilogue."""
    i = pl.program_id(0)

    @pl.when(i == 0)
    def _():
        acc_ref[...] = jnp.zeros_like(acc_ref)

    agg = jnp.dot(adj_ref[...].astype(jnp.bfloat16), g1_ref[...],
                  preferred_element_type=jnp.float32)
    h2 = jnp.maximum(dinv_ref[...] * agg + b2_ref[...], 0.0)        # [TILE_M, 128]
    # global mean pool contribution of this tile: [B, TILE_M] @ [TILE_M, 128]
    acc_ref[...] += jnp.dot(pool_ref[...], h2.astype(jnp.bfloat16),
                            preferred_element_type=jnp.float32)

    @pl.when(i == pl.num_programs(0) - 1)
    def _():
        logits = jnp.dot(acc_ref[...].astype(jnp.bfloat16), wfc_ref[...],
                         preferred_element_type=jnp.float32) + bfc_ref[...]
        m = jnp.max(logits, axis=-1, keepdims=True)
        lse = m + jnp.log(jnp.sum(jnp.exp(logits - m), axis=-1, keepdims=True))
        out_ref[...] = logits - lse


# ---------------------------------------------------------------------------
# pallas_call wrappers
# ---------------------------------------------------------------------------
def gcn_layer1(adj_i8, x_scaled, w1, b1, w2, dinv_col, *, tile_m=TILE_M):
    n_pad, f_in = x_scaled.shape
    f_mid = w1.shape[1]
    f_out = w2.shape[1]
    return pl.pallas_call(
        _layer1_kernel,
        out_shape=jax.ShapeDtypeStruct((n_pad, f_out), jnp.bfloat16),
        grid_spec=pltpu.PrefetchScalarGridSpec(
            num_scalar_prefetch=0,
            grid=(n_pad // tile_m,),
            in_specs=[
                pl.BlockSpec((tile_m, n_pad), lambda i: (i, 0)),   # S row tile (int8)
                pl.BlockSpec((n_pad, f_in), lambda i: (0, 0)),     # dinv*x, resident
                pl.BlockSpec((f_in, f_mid), lambda i: (0, 0)),     # W1 (bf16)
                pl.BlockSpec((1, f_mid), lambda i: (0, 0)),        # b1
                pl.BlockSpec((f_mid, f_out), lambda i: (0, 0)),    # W2 (bf16)
                pl.BlockSpec((tile_m, 1), lambda i: (i, 0)),       # dinv (dst rows)
            ],
            out_specs=pl.BlockSpec((tile_m, f_out), lambda i: (i, 0)),
            scratch_shapes=[pltpu.VMEM((n_pad, f_mid), jnp.bfloat16)],   # xw1
        ),
        compiler_params=_COMPILER_PARAMS,
    )(adj_i8, x_scaled, w1, b1, w2, dinv_col)


def gcn_layer2_pool_fc(adj_i8, g1, b2, dinv_col, pool_mat, w_fc, b_fc,
                       *, tile_m=TILE_M):
    n_pad, f_out = g1.shape
    n_graphs = pool_mat.shape[0]
    n_classes = w_fc.shape[1]
    return pl.pallas_call(
        _layer2_kernel,
        out_shape=jax.ShapeDtypeStruct((n_graphs, n_classes), jnp.float32),
        grid_spec=pltpu.PrefetchScalarGridSpec(
            num_scalar_prefetch=0,
            grid=(n_pad // tile_m,),
            in_specs=[
                pl.BlockSpec((tile_m, n_pad), lambda i: (i, 0)),      # S row tile
                pl.BlockSpec((n_pad, f_out), lambda i: (0, 0)),       # g1, resident
                pl.BlockSpec((1, f_out), lambda i: (0, 0)),           # b2
                pl.BlockSpec((tile_m, 1), lambda i: (i, 0)),          # dinv (dst rows)
                pl.BlockSpec((n_graphs, tile_m), lambda i: (0, i)),   # pool cols (bf16)
                pl.BlockSpec((f_out, n_classes), lambda i: (0, 0)),   # fc weight (bf16)
                pl.BlockSpec((1, n_classes), lambda i: (0, 0)),       # fc bias
            ],
            out_specs=pl.BlockSpec((n_graphs, n_classes), lambda i: (0, 0)),
            scratch_shapes=[pltpu.VMEM((n_graphs, f_out), jnp.float32)],  # pooled acc
        ),
        compiler_params=_COMPILER_PARAMS,
    )(adj_i8, g1, b2, dinv_col, pool_mat, w_fc, b_fc)


# ---------------------------------------------------------------------------
# Full forward (eval mode)
# ---------------------------------------------------------------------------
def gcn_forward(x, edge_index, batch, params, *, num_graphs, tile_m=TILE_M):
    n = x.shape[0]
    n_pad = pl.cdiv(n, tile_m) * tile_m
    pad = n_pad - n

    # S = A + I built directly in padded shape and final streaming dtype (int8),
    # with a single scatter (edges + self loops).  Entries are exact 0/1.
    idx = jnp.arange(n, dtype=edge_index.dtype)
    rows = jnp.concatenate([edge_index[1], idx])       # dst
    cols = jnp.concatenate([edge_index[0], idx])       # src
    s_i8 = jnp.zeros((n_pad, n_pad), jnp.int8).at[rows, cols].set(1)
    # TODO(synk): parallel (duplicate) edges collapse to 1 here; PyG scatter-add
    # would count them, and edge weights are not supported.

    deg = jnp.sum(s_i8, axis=1, dtype=jnp.int32).astype(jnp.float32)
    dinv = jnp.where(deg > 0.0, jax.lax.rsqrt(deg), 0.0)            # [n_pad]
    dinv_col = dinv[:, None]                                         # [n_pad, 1]

    # normalized one-hot pooling matrix (global mean pool); padded nodes map nowhere
    batch_p = jnp.concatenate(
        [batch.astype(jnp.int32), jnp.full((pad,), num_graphs, jnp.int32)])
    onehot = (batch_p[None, :] == jnp.arange(num_graphs)[:, None]).astype(jnp.float32)
    counts = jnp.maximum(jnp.sum(onehot, axis=1, keepdims=True), 1.0)
    pool_mat = (onehot / counts).astype(jnp.bfloat16)                # [B, n_pad]

    # pre-scale node features by dinv (source-side D^-1/2 folded out of S)
    x_scaled = (jnp.pad(x, ((0, pad), (0, 0))) * dinv_col).astype(jnp.bfloat16)

    g1 = gcn_layer1(
        s_i8, x_scaled,
        params["w1"].astype(jnp.bfloat16), params["b1"],
        params["w2"].astype(jnp.bfloat16), dinv_col, tile_m=tile_m)
    return gcn_layer2_pool_fc(
        s_i8, g1, params["b2"], dinv_col, pool_mat,
        params["w_fc"].astype(jnp.bfloat16), params["b_fc"], tile_m=tile_m)


# ---------------------------------------------------------------------------
# Pure-JAX f32 reference (for a loose numerical check) and param init
# ---------------------------------------------------------------------------
def gcn_reference(x, edge_index, batch, params, *, num_graphs):
    n = x.shape[0]
    a = jnp.zeros((n, n), jnp.float32).at[edge_index[1], edge_index[0]].set(1.0)
    a = jnp.maximum(a, jnp.eye(n, dtype=jnp.float32))
    d = jnp.sum(a, axis=1)
    dinv = jnp.where(d > 0, jax.lax.rsqrt(d), 0.0)
    a_hat = a * dinv[:, None] * dinv[None, :]
    h = jax.nn.relu(a_hat @ (x @ params["w1"]) + params["b1"])
    h = jax.nn.relu(a_hat @ (h @ params["w2"]) + params["b2"])
    onehot = (batch[None, :] == jnp.arange(num_graphs)[:, None]).astype(jnp.float32)
    pooled = (onehot @ h) / jnp.maximum(onehot.sum(1, keepdims=True), 1.0)
    logits = pooled @ params["w_fc"] + params["b_fc"]
    return jax.nn.log_softmax(logits, axis=1)


def init_params(key, num_features, num_classes):
    ks = jax.random.split(key, 3)

    def glorot(k, shape):
        fan_in, fan_out = shape[-2], shape[-1]
        lim = (6.0 / (fan_in + fan_out)) ** 0.5
        return jax.random.uniform(k, shape, jnp.float32, -lim, lim)

    return {
        "w1": glorot(ks[0], (num_features, 64)),
        "b1": jnp.zeros((1, 64), jnp.float32),
        "w2": glorot(ks[1], (64, 128)),
        "b2": jnp.zeros((1, 128), jnp.float32),
        "w_fc": glorot(ks[2], (128, num_classes)),
        "b_fc": jnp.zeros((1, num_classes), jnp.float32),
    }


if __name__ == "__main__":
    num_features, num_classes = 16, 3
    ring = 100                      # nodes per graph (2 graphs -> N=200, N_pad=256)
    n_nodes, n_graphs = 2 * ring, 2

    key = jax.random.PRNGKey(0)
    k_x, k_p = jax.random.split(key)

    x = jax.random.normal(k_x, (n_nodes, num_features), jnp.float32)
    batch = jnp.concatenate(
        [jnp.zeros(ring, jnp.int32), jnp.ones(ring, jnp.int32)])

    # two bidirectional rings (one per graph)
    src, dst = [], []
    for base in (0, ring):
        for i in range(ring):
            a, b = base + i, base + (i + 1) % ring
            src += [a, b]
            dst += [b, a]
    edge_index = jnp.array([src, dst], jnp.int32)   # [2, E]

    params = init_params(k_p, num_features, num_classes)

    fwd = jax.jit(functools.partial(gcn_forward, num_graphs=n_graphs))
    out = jax.block_until_ready(fwd(x, edge_index, batch, params))

    assert out.shape == (n_graphs, num_classes)
    assert bool(jnp.all(jnp.isfinite(out)))
    # valid log-softmax rows (computed in f32 inside the kernel epilogue)
    assert bool(jnp.all(jnp.abs(jnp.sum(jnp.exp(out), axis=1) - 1.0) < 1e-4))
    # loose tolerance vs f32 reference (kernel uses bf16 operands / f32 accumulation)
    ref = gcn_reference(x, edge_index, batch, params, num_graphs=n_graphs)
    assert bool(jnp.max(jnp.abs(out - ref)) < 2e-1)
    print("KERNEL_OK")
</pallas_src>

<mosaic_0001>
module attributes {stable_mosaic.version = 11 : i64} {
  func.func @_layer1_kernel(%arg0: i32, %arg1: memref<256x256xi8, #tpu.memory_space<vmem>>, %arg2: memref<256x16xbf16, #tpu.memory_space<vmem>>, %arg3: memref<16x64xbf16, #tpu.memory_space<vmem>>, %arg4: memref<1x64xf32, #tpu.memory_space<vmem>>, %arg5: memref<64x128xbf16, #tpu.memory_space<vmem>>, %arg6: memref<256x1xf32, #tpu.memory_space<vmem>>, %arg7: memref<256x128xbf16, #tpu.memory_space<vmem>>, %arg8: memref<256x64xbf16, #tpu.memory_space<vmem>>) attributes {dimension_semantics = [#tpu.dimension_semantics<arbitrary>], iteration_bounds = array<i64: 1>, scalar_prefetch = 0 : i64, scratch_operands = 1 : i64, tpu.core_type = #tpu.core_type<tc>, window_params = [{transform_indices = @transform_0, window_bounds = array<i64: 256, 256>}, {pipeline_mode = #tpu.pipeline_mode<synchronous>, transform_indices = @transform_1, window_bounds = array<i64: 256, 16>}, {pipeline_mode = #tpu.pipeline_mode<synchronous>, transform_indices = @transform_2, window_bounds = array<i64: 16, 64>}, {pipeline_mode = #tpu.pipeline_mode<synchronous>, transform_indices = @transform_3, window_bounds = array<i64: 1, 64>}, {pipeline_mode = #tpu.pipeline_mode<synchronous>, transform_indices = @transform_4, window_bounds = array<i64: 64, 128>}, {transform_indices = @transform_5, window_bounds = array<i64: 256, 1>}, {transform_indices = @transform_6, window_bounds = array<i64: 256, 128>}]} {
    %c0_i32 = arith.constant 0 : i32
    %0 = arith.cmpi eq, %arg0, %c0_i32 : i32
    %1 = arith.extui %0 : i1 to i32
    %c0_i32_0 = arith.constant 0 : i32
    %2 = arith.cmpi ne, %1, %c0_i32_0 : i32
    scf.if %2 {
      %c0_16 = arith.constant 0 : index
      %c0_17 = arith.constant 0 : index
      %23 = vector.load %arg2[%c0_16, %c0_17] : memref<256x16xbf16, #tpu.memory_space<vmem>>, vector<256x16xbf16>
      %c0_18 = arith.constant 0 : index
      %c0_19 = arith.constant 0 : index
      %24 = vector.load %arg3[%c0_18, %c0_19] : memref<16x64xbf16, #tpu.memory_space<vmem>>, vector<16x64xbf16>
      %cst_20 = arith.constant dense<0.000000e+00> : vector<256x64xf32>
      %25 = tpu.matmul %23, %24, %cst_20 {dimension_numbers = #tpu.dot_dimension_numbers<[1], [0], [0], [1], [0, 0, 1, 1], [], []>} : vector<256x16xbf16>, vector<16x64xbf16>, vector<256x64xf32> -> vector<256x64xf32>
      %26 = arith.truncf %25 : vector<256x64xf32> to vector<256x64xbf16>
      %c0_21 = arith.constant 0 : index
      %c0_22 = arith.constant 0 : index
      %27 = vector.load %arg8[%c0_21, %c0_22] : memref<256x64xbf16, #tpu.memory_space<vmem>>, vector<256x64xbf16>
      tpu.vector_store %arg8[%c0_21, %c0_22], %26 {strides = array<i32>} : memref<256x64xbf16, #tpu.memory_space<vmem>>, vector<256x64xbf16>,
    } else {
    }
    %c0 = arith.constant 0 : index
    %c0_1 = arith.constant 0 : index
    %3 = vector.load %arg1[%c0, %c0_1] : memref<256x256xi8, #tpu.memory_space<vmem>>, vector<256x256xi8>
    %4 = arith.sitofp %3 : vector<256x256xi8> to vector<256x256xbf16>
    %c0_2 = arith.constant 0 : index
    %c0_3 = arith.constant 0 : index
    %5 = vector.load %arg8[%c0_2, %c0_3] : memref<256x64xbf16, #tpu.memory_space<vmem>>, vector<256x64xbf16>
    %cst = arith.constant dense<0.000000e+00> : vector<256x64xf32>
    %6 = tpu.matmul %4, %5, %cst {dimension_numbers = #tpu.dot_dimension_numbers<[1], [0], [0], [1], [0, 0, 1, 1], [], []>} : vector<256x256xbf16>, vector<256x64xbf16>, vector<256x64xf32> -> vector<256x64xf32>
    %c0_4 = arith.constant 0 : index
    %c0_5 = arith.constant 0 : index
    %7 = vector.load %arg6[%c0_4, %c0_5] : memref<256x1xf32, #tpu.memory_space<vmem>>, vector<256x1xf32>
    %8 = vector.broadcast %7 : vector<256x1xf32> to vector<256x64xf32>
    %9 = arith.mulf %8, %6 : vector<256x64xf32>
    %c0_6 = arith.constant 0 : index
    %c0_7 = arith.constant 0 : index
    %10 = vector.load %arg4[%c0_6, %c0_7] : memref<1x64xf32, #tpu.memory_space<vmem>>, vector<1x64xf32>
    %11 = vector.broadcast %10 : vector<1x64xf32> to vector<256x64xf32>
    %12 = arith.addf %9, %11 : vector<256x64xf32>
    %cst_8 = arith.constant 0.000000e+00 : f32
    %13 = vector.broadcast %cst_8 : f32 to vector<256x64xf32>
    %14 = arith.maximumf %12, %13 : vector<256x64xf32>
    %15 = arith.truncf %14 : vector<256x64xf32> to vector<256x64xbf16>
    %c0_9 = arith.constant 0 : index
    %c0_10 = arith.constant 0 : index
    %16 = vector.load %arg5[%c0_9, %c0_10] : memref<64x128xbf16, #tpu.memory_space<vmem>>, vector<64x128xbf16>
    %cst_11 = arith.constant dense<0.000000e+00> : vector<256x128xf32>
    %17 = tpu.matmul %15, %16, %cst_11 {dimension_numbers = #tpu.dot_dimension_numbers<[1], [0], [0], [1], [0, 0, 1, 1], [], []>} : vector<256x64xbf16>, vector<64x128xbf16>, vector<256x128xf32> -> vector<256x128xf32>
    %c0_12 = arith.constant 0 : index
    %c0_13 = arith.constant 0 : index
    %18 = vector.load %arg6[%c0_12, %c0_13] : memref<256x1xf32, #tpu.memory_space<vmem>>, vector<256x1xf32>
    %19 = vector.broadcast %18 : vector<256x1xf32> to vector<256x128xf32>
    %20 = arith.mulf %19, %17 : vector<256x128xf32>
    %21 = arith.truncf %20 : vector<256x128xf32> to vector<256x128xbf16>
    %c0_14 = arith.constant 0 : index
    %c0_15 = arith.constant 0 : index
    %22 = vector.load %arg7[%c0_14, %c0_15] : memref<256x128xbf16, #tpu.memory_space<vmem>>, vector<256x128xbf16>
    tpu.vector_store %arg7[%c0_14, %c0_15], %21 {strides = array<i32>} : memref<256x128xbf16, #tpu.memory_space<vmem>>, vector<256x128xbf16>,
    return
  }
  func.func @transform_0(%arg0: i32) -> (i32, i32) {
    %c0_i32 = arith.constant 0 : i32
    %c0_i32_0 = arith.constant 0 : i32
    return %arg0, %c0_i32 : i32, i32
  }
  func.func @transform_1(%arg0: i32) -> (i32, i32) {
    %c0_i32 = arith.constant 0 : i32
    %c0_i32_0 = arith.constant 0 : i32
    %c0_i32_1 = arith.constant 0 : i32
    return %c0_i32, %c0_i32_0 : i32, i32
  }
  func.func @transform_2(%arg0: i32) -> (i32, i32) {
    %c0_i32 = arith.constant 0 : i32
    %c0_i32_0 = arith.constant 0 : i32
    %c0_i32_1 = arith.constant 0 : i32
    return %c0_i32, %c0_i32_0 : i32, i32
  }
  func.func @transform_3(%arg0: i32) -> (i32, i32) {
    %c0_i32 = arith.constant 0 : i32
    %c0_i32_0 = arith.constant 0 : i32
    %c0_i32_1 = arith.constant 0 : i32
    return %c0_i32, %c0_i32_0 : i32, i32
  }
  func.func @transform_4(%arg0: i32) -> (i32, i32) {
    %c0_i32 = arith.constant 0 : i32
    %c0_i32_0 = arith.constant 0 : i32
    %c0_i32_1 = arith.constant 0 : i32
    return %c0_i32, %c0_i32_0 : i32, i32
  }
  func.func @transform_5(%arg0: i32) -> (i32, i32) {
    %c0_i32 = arith.constant 0 : i32
    %c0_i32_0 = arith.constant 0 : i32
    return %arg0, %c0_i32 : i32, i32
  }
  func.func @transform_6(%arg0: i32) -> (i32, i32) {
    %c0_i32 = arith.constant 0 : i32
    %c0_i32_0 = arith.constant 0 : i32
    return %arg0, %c0_i32 : i32, i32
  }
}

module attributes {stable_mosaic.version = 11 : i64} {
  func.func @_layer2_kernel(%arg0: i32, %arg1: memref<256x256xi8, #tpu.memory_space<vmem>>, %arg2: memref<256x128xbf16, #tpu.memory_space<vmem>>, %arg3: memref<1x128xf32, #tpu.memory_space<vmem>>, %arg4: memref<256x1xf32, #tpu.memory_space<vmem>>, %arg5: memref<2x256xbf16, #tpu.memory_space<vmem>>, %arg6: memref<128x3xbf16, #tpu.memory_space<vmem>>, %arg7: memref<1x3xf32, #tpu.memory_space<vmem>>, %arg8: memref<2x3xf32, #tpu.memory_space<vmem>>, %arg9: memref<2x128xf32, #tpu.memory_space<vmem>>) attributes {dimension_semantics = [#tpu.dimension_semantics<arbitrary>], iteration_bounds = array<i64: 1>, scalar_prefetch = 0 : i64, scratch_operands = 1 : i64, tpu.core_type = #tpu.core_type<tc>, window_params = [{transform_indices = @transform_0, window_bounds = array<i64: 256, 256>}, {pipeline_mode = #tpu.pipeline_mode<synchronous>, transform_indices = @transform_1, window_bounds = array<i64: 256, 128>}, {pipeline_mode = #tpu.pipeline_mode<synchronous>, transform_indices = @transform_2, window_bounds = array<i64: 1, 128>}, {transform_indices = @transform_3, window_bounds = array<i64: 256, 1>}, {transform_indices = @transform_4, window_bounds = array<i64: 2, 256>}, {pipeline_mode = #tpu.pipeline_mode<synchronous>, transform_indices = @transform_5, window_bounds = array<i64: 128, 3>}, {pipeline_mode = #tpu.pipeline_mode<synchronous>, transform_indices = @transform_6, window_bounds = array<i64: 1, 3>}, {pipeline_mode = #tpu.pipeline_mode<synchronous>, transform_indices = @transform_7, window_bounds = array<i64: 2, 3>}]} {
    %c0_i32 = arith.constant 0 : i32
    %0 = arith.cmpi eq, %arg0, %c0_i32 : i32
    %1 = arith.extui %0 : i1 to i32
    %c0_i32_0 = arith.constant 0 : i32
    %2 = arith.cmpi ne, %1, %c0_i32_0 : i32
    scf.if %2 {
      %cst_18 = arith.constant 0.000000e+00 : f32
      %24 = vector.broadcast %cst_18 : f32 to vector<2x128xf32>
      %c0_19 = arith.constant 0 : index
      %c0_20 = arith.constant 0 : index
      %25 = vector.load %arg9[%c0_19, %c0_20] : memref<2x128xf32, #tpu.memory_space<vmem>>, vector<2x128xf32>
      tpu.vector_store %arg9[%c0_19, %c0_20], %24 {strides = array<i32>} : memref<2x128xf32, #tpu.memory_space<vmem>>, vector<2x128xf32>,
    } else {
    }
    %c0 = arith.constant 0 : index
    %c0_1 = arith.constant 0 : index
    %3 = vector.load %arg1[%c0, %c0_1] : memref<256x256xi8, #tpu.memory_space<vmem>>, vector<256x256xi8>
    %4 = arith.sitofp %3 : vector<256x256xi8> to vector<256x256xbf16>
    %c0_2 = arith.constant 0 : index
    %c0_3 = arith.constant 0 : index
    %5 = vector.load %arg2[%c0_2, %c0_3] : memref<256x128xbf16, #tpu.memory_space<vmem>>, vector<256x128xbf16>
    %cst = arith.constant dense<0.000000e+00> : vector<256x128xf32>
    %6 = tpu.matmul %4, %5, %cst {dimension_numbers = #tpu.dot_dimension_numbers<[1], [0], [0], [1], [0, 0, 1, 1], [], []>} : vector<256x256xbf16>, vector<256x128xbf16>, vector<256x128xf32> -> vector<256x128xf32>
    %c0_4 = arith.constant 0 : index
    %c0_5 = arith.constant 0 : index
    %7 = vector.load %arg4[%c0_4, %c0_5] : memref<256x1xf32, #tpu.memory_space<vmem>>, vector<256x1xf32>
    %8 = vector.broadcast %7 : vector<256x1xf32> to vector<256x128xf32>
    %9 = arith.mulf %8, %6 : vector<256x128xf32>
    %c0_6 = arith.constant 0 : index
    %c0_7 = arith.constant 0 : index
    %10 = vector.load %arg3[%c0_6, %c0_7] : memref<1x128xf32, #tpu.memory_space<vmem>>, vector<1x128xf32>
    %11 = vector.broadcast %10 : vector<1x128xf32> to vector<256x128xf32>
    %12 = arith.addf %9, %11 : vector<256x128xf32>
    %cst_8 = arith.constant 0.000000e+00 : f32
    %13 = vector.broadcast %cst_8 : f32 to vector<256x128xf32>
    %14 = arith.maximumf %12, %13 : vector<256x128xf32>
    %c0_9 = arith.constant 0 : index
    %c0_10 = arith.constant 0 : index
    %15 = vector.load %arg9[%c0_9, %c0_10] : memref<2x128xf32, #tpu.memory_space<vmem>>, vector<2x128xf32>
    %c0_11 = arith.constant 0 : index
    %c0_12 = arith.constant 0 : index
    %16 = vector.load %arg5[%c0_11, %c0_12] : memref<2x256xbf16, #tpu.memory_space<vmem>>, vector<2x256xbf16>
    %17 = arith.truncf %14 : vector<256x128xf32> to vector<256x128xbf16>
    %cst_13 = arith.constant dense<0.000000e+00> : vector<2x128xf32>
    %18 = tpu.matmul %16, %17, %cst_13 {dimension_numbers = #tpu.dot_dimension_numbers<[1], [0], [0], [1], [0, 0, 1, 1], [], []>} : vector<2x256xbf16>, vector<256x128xbf16>, vector<2x128xf32> -> vector<2x128xf32>
    %19 = arith.addf %15, %18 : vector<2x128xf32>
    %c0_14 = arith.constant 0 : index
    %c0_15 = arith.constant 0 : index
    %20 = vector.load %arg9[%c0_14, %c0_15] : memref<2x128xf32, #tpu.memory_space<vmem>>, vector<2x128xf32>
    tpu.vector_store %arg9[%c0_14, %c0_15], %19 {strides = array<i32>} : memref<2x128xf32, #tpu.memory_space<vmem>>, vector<2x128xf32>,
    %c0_i32_16 = arith.constant 0 : i32
    %21 = arith.cmpi eq, %arg0, %c0_i32_16 : i32
    %22 = arith.extui %21 : i1 to i32
    %c0_i32_17 = arith.constant 0 : i32
    %23 = arith.cmpi ne, %22, %c0_i32_17 : i32
    scf.if %23 {
      %c0_18 = arith.constant 0 : index
      %c0_19 = arith.constant 0 : index
      %24 = vector.load %arg9[%c0_18, %c0_19] : memref<2x128xf32, #tpu.memory_space<vmem>>, vector<2x128xf32>
      %25 = arith.truncf %24 : vector<2x128xf32> to vector<2x128xbf16>
      %c0_20 = arith.constant 0 : index
      %c0_21 = arith.constant 0 : index
      %26 = vector.load %arg6[%c0_20, %c0_21] : memref<128x3xbf16, #tpu.memory_space<vmem>>, vector<128x3xbf16>
      %cst_22 = arith.constant dense<0.000000e+00> : vector<2x3xf32>
      %27 = tpu.matmul %25, %26, %cst_22 {dimension_numbers = #tpu.dot_dimension_numbers<[1], [0], [0], [1], [0, 0, 1, 1], [], []>} : vector<2x128xbf16>, vector<128x3xbf16>, vector<2x3xf32> -> vector<2x3xf32>
      %c0_23 = arith.constant 0 : index
      %c0_24 = arith.constant 0 : index
      %28 = vector.load %arg7[%c0_23, %c0_24] : memref<1x3xf32, #tpu.memory_space<vmem>>, vector<1x3xf32>
      %29 = vector.broadcast %28 : vector<1x3xf32> to vector<2x3xf32>
      %30 = arith.addf %27, %29 : vector<2x3xf32>
      %cst_25 = arith.constant dense<0xFF800000> : vector<2xf32>
      %31 = vector.multi_reduction <maximumf>, %30, %cst_25 [1] : vector<2x3xf32> to vector<2xf32>
      %32 = vector.shape_cast %31 : vector<2xf32> to vector<2x1xf32>
      %33 = vector.broadcast %32 : vector<2x1xf32> to vector<2x3xf32>
      %34 = arith.subf %30, %33 : vector<2x3xf32>
      %35 = math.exp %34 : vector<2x3xf32>
      %cst_26 = arith.constant dense<0.000000e+00> : vector<2xf32>
      %36 = vector.multi_reduction <add>, %35, %cst_26 [1] : vector<2x3xf32> to vector<2xf32>
      %37 = vector.shape_cast %36 : vector<2xf32> to vector<2x1xf32>
      %38 = math.log %37 : vector<2x1xf32>
      %39 = arith.addf %32, %38 : vector<2x1xf32>
      %40 = vector.broadcast %39 : vector<2x1xf32> to vector<2x3xf32>
      %41 = arith.subf %30, %40 : vector<2x3xf32>
      %c0_27 = arith.constant 0 : index
      %c0_28 = arith.constant 0 : index
      %42 = vector.load %arg8[%c0_27, %c0_28] : memref<2x3xf32, #tpu.memory_space<vmem>>, vector<2x3xf32>
      tpu.vector_store %arg8[%c0_27, %c0_28], %41 {strides = array<i32>} : memref<2x3xf32, #tpu.memory_space<vmem>>, vector<2x3xf32>,
    } else {
    }
    return
  }
  func.func @transform_0(%arg0: i32) -> (i32, i32) {
    %c0_i32 = arith.constant 0 : i32
    %c0_i32_0 = arith.constant 0 : i32
    return %arg0, %c0_i32 : i32, i32
  }
  func.func @transform_1(%arg0: i32) -> (i32, i32) {
    %c0_i32 = arith.constant 0 : i32
    %c0_i32_0 = arith.constant 0 : i32
    %c0_i32_1 = arith.constant 0 : i32
    return %c0_i32, %c0_i32_0 : i32, i32
  }
  func.func @transform_2(%arg0: i32) -> (i32, i32) {
    %c0_i32 = arith.constant 0 : i32
    %c0_i32_0 = arith.constant 0 : i32
    %c0_i32_1 = arith.constant 0 : i32
    return %c0_i32, %c0_i32_0 : i32, i32
  }
  func.func @transform_3(%arg0: i32) -> (i32, i32) {
    %c0_i32 = arith.constant 0 : i32
    %c0_i32_0 = arith.constant 0 : i32
    return %arg0, %c0_i32 : i32, i32
  }
  func.func @transform_4(%arg0: i32) -> (i32, i32) {
    %c0_i32 = arith.constant 0 : i32
    %c0_i32_0 = arith.constant 0 : i32
    return %c0_i32, %arg0 : i32, i32
  }
  func.func @transform_5(%arg0: i32) -> (i32, i32) {
    %c0_i32 = arith.constant 0 : i32
    %c0_i32_0 = arith.constant 0 : i32
    %c0_i32_1 = arith.constant 0 : i32
    return %c0_i32, %c0_i32_0 : i32, i32
  }
  func.func @transform_6(%arg0: i32) -> (i32, i32) {
    %c0_i32 = arith.constant 0 : i32
    %c0_i32_0 = arith.constant 0 : i32
    %c0_i32_1 = arith.constant 0 : i32
    return %c0_i32, %c0_i32_0 : i32, i32
  }
  func.func @transform_7(%arg0: i32) -> (i32, i32) {
    %c0_i32 = arith.constant 0 : i32
    %c0_i32_0 = arith.constant 0 : i32
    %c0_i32_1 = arith.constant 0 : i32
    return %c0_i32, %c0_i32_0 : i32, i32
  }
}

</mosaic_0001>

<llo_original>
// kernel: gcn_forward.3
$region0: #{gcn_forward.3}
  #allocation0 [shape = 'u32[]', space=smem, size = 0x4, offset = 0x4, fixed_abs, tag = 'smem constant byte address 0x4 - core index']
  #allocation1 [shape = 'u32[72,128]{1,0:T(1,128)}', space=vmem, size = 0x9000, scoped, tag = 'internal scratch']
  #allocation2 [shape = 'f32[2,128]{1,0:T(2,128)}', space=vmem, size = 0x400, scoped, tag = 'scratch operand']
  %s0 = inlined_call_operand.vmem [shape: s8[256,256], index: 0, kind: input, shape index: {}]
  %s1 = inlined_call_operand.vmem [shape: bf16[256,128], index: 1, kind: input, shape index: {}]
  %s2 = inlined_call_operand.vmem [shape: f32[1,128], index: 2, kind: input, shape index: {}]
  %s3 = inlined_call_operand.vmem [shape: f32[256,1], index: 3, kind: input, shape index: {}]
  %s4 = inlined_call_operand.vmem [shape: bf16[2,256], index: 4, kind: input, shape index: {}]
  %s5 = inlined_call_operand.vmem [shape: bf16[128,3], index: 5, kind: input, shape index: {}]
  %s6 = inlined_call_operand.vmem [shape: f32[1,3], index: 6, kind: input, shape index: {}]
  %s7 = inlined_call_operand.hbm [shape: f32[2,3], index: 7, kind: output, shape index: {}]
  %s8 = sld [smem:[#allocation0]]
  $region46: #{gcn_forward.3} parent=0
    _
  %s10 = ssub.s32 1, %s8
  %s11 = scalar_select 0, %s10, %s8
  $region1: #{gcn_forward.3} parent=0
    #allocation3 [shape = 'u8[1024]{0}', space=vmem, size = 0x400, scoped, tag = 'output window, operand 0, single buffered']
    #allocation4 [shape = 's32[1]{0}', space=sflag, size = 0x4, scoped, tag = 'scoped memory for gcn_forward.3']
    %12 = vsyncpa [#allocation4], 0
    // Predicated region
    $region2: #{gcn_forward.3} parent=1 // pred_check
      _
    $region3: #{gcn_forward.3} parent=1 // pred_check_branch
      %14 = sbr.rel (0) target = $region5
    $region4: #{gcn_forward.3} parent=1 // pred_region
      _
    $region5: #{gcn_forward.3} parent=1 // pred_fallthru
      _
    // Predicated region
    $region6: #{gcn_forward.3} parent=1 // pred_check
      _
    $region7: #{gcn_forward.3} parent=1 // pred_check_branch
      %16 = sbr.rel (0) target = $region9
    $region8: #{gcn_forward.3} parent=1 // pred_region
      _
    $region9: #{gcn_forward.3} parent=1 // pred_fallthru
      _
    // Predicated region
    $region10: #{gcn_forward.3} parent=1 // pred_check
      _
    $region11: #{gcn_forward.3} parent=1 // pred_check_branch
      %18 = sbr.rel (0) target = $region13
    $region12: #{gcn_forward.3} parent=1 // pred_region
      _
    $region13: #{gcn_forward.3} parent=1 // pred_fallthru
      _
    // Predicated region
    $region14: #{gcn_forward.3} parent=1 // pred_check
      _
    $region15: #{gcn_forward.3} parent=1 // pred_check_branch
      %20 = sbr.rel (0) target = $region17
    $region16: #{gcn_forward.3} parent=1 // pred_region
      _
    $region17: #{gcn_forward.3} parent=1 // pred_fallthru
      _
    // Predicated region
    $region18: #{gcn_forward.3} parent=1 // pred_check
      _
    $region19: #{gcn_forward.3} parent=1 // pred_check_branch
      %22 = sbr.rel (0) target = $region21
    $region20: #{gcn_forward.3} parent=1 // pred_region
      _
    $region21: #{gcn_forward.3} parent=1 // pred_fallthru
      _
    // Predicated region
    $region22: #{gcn_forward.3} parent=1 // pred_check
      _
    $region23: #{gcn_forward.3} parent=1 // pred_check_branch
      %24 = sbr.rel (0) target = $region25
    $region24: #{gcn_forward.3} parent=1 // pred_region
      _
    $region25: #{gcn_forward.3} parent=1 // pred_fallthru
      _
    // Predicated region
    $region26: #{gcn_forward.3} parent=1 // pred_check
      _
    $region27: #{gcn_forward.3} parent=1 // pred_check_branch
      %26 = sbr.rel (0) target = $region29
    $region28: #{gcn_forward.3} parent=1 // pred_region
      _
    $region29: #{gcn_forward.3} parent=1 // pred_fallthru
      _
    %p27 = scmp.eq.s32.totalorder 0, 0
    // Predicated region
    $region30: #{gcn_forward.3} parent=1 // pred_check
      %p28 = pneg %p27
    $region31: #{gcn_forward.3} parent=1 // pred_check_branch
      %30 = sbr.rel (%p28) target = $region33
    $region32: #{gcn_forward.3} parent=1 // pred_region
      %31 = vst [vmem:[#allocation2] sm:$0x3] 0.0
    $region33: #{gcn_forward.3} parent=1 // pred_fallthru
      _
    %v32 = vld [vmem:[%s0] sm:$0xf]
    %v33 = vld [vmem:[%s0 + $0x4] sm:$0xf]
    %v34 = vld [vmem:[%s0 + $0x8] sm:$0xf]
    %v35 = vld [vmem:[%s0 + $0xc] sm:$0xf]
    %v36 = vld [vmem:[%s0 + $0x10] sm:$0xf]
    %v37 = vld [vmem:[%s0 + $0x14] sm:$0xf]
    %v38 = vld [vmem:[%s0 + $0x18] sm:$0xf]
    %v39 = vld [vmem:[%s0 + $0x1c] sm:$0xf]
    %v40 = vld [vmem:[%s0 + $0x20] sm:$0xf]
    %v41 = vld [vmem:[%s0 + $0x24] sm:$0xf]
    %v42 = vld [vmem:[%s0 + $0x28] sm:$0xf]
    %v43 = vld [vmem:[%s0 + $0x2c] sm:$0xf]
    %v44 = vld [vmem:[%s0 + $0x30] sm:$0xf]
    %v45 = vld [vmem:[%s0 + $0x34] sm:$0xf]
    %v46 = vld [vmem:[%s0 + $0x38] sm:$0xf]
    %v47 = vld [vmem:[%s0 + $0x3c] sm:$0xf]
    %v48 = vld [vmem:[%s0 + $0x40] sm:$0xf]
    %v49 = vld [vmem:[%s0 + $0x44] sm:$0xf]
    %v50 = vld [vmem:[%s0 + $0x48] sm:$0xf]
    %v51 = vld [vmem:[%s0 + $0x4c] sm:$0xf]
    %v52 = vld [vmem:[%s0 + $0x50] sm:$0xf]
    %v53 = vld [vmem:[%s0 + $0x54] sm:$0xf]
    %v54 = vld [vmem:[%s0 + $0x58] sm:$0xf]
    %v55 = vld [vmem:[%s0 + $0x5c] sm:$0xf]
    %v56 = vld [vmem:[%s0 + $0x60] sm:$0xf]
    %v57 = vld [vmem:[%s0 + $0x64] sm:$0xf]
    %v58 = vld [vmem:[%s0 + $0x68] sm:$0xf]
    %v59 = vld [vmem:[%s0 + $0x6c] sm:$0xf]
    %v60 = vld [vmem:[%s0 + $0x70] sm:$0xf]
    %v61 = vld [vmem:[%s0 + $0x74] sm:$0xf]
    %v62 = vld [vmem:[%s0 + $0x78] sm:$0xf]
    %v63 = vld [vmem:[%s0 + $0x7c] sm:$0xf]
    %v64 = vunpack.c.0.s8 %v32
    %v65 = vunpack.c.1.s8 %v32
    %v66 = vunpack.c.0.s8 %v33
    %v67 = vunpack.c.1.s8 %v33
    %v68 = vunpack.c.0.s8 %v34
    %v69 = vunpack.c.1.s8 %v34
    %v70 = vunpack.c.0.s8 %v35
    %v71 = vunpack.c.1.s8 %v35
    %v72 = vunpack.c.0.s8 %v36
    %v73 = vunpack.c.1.s8 %v36
    %v74 = vunpack.c.0.s8 %v37
    %v75 = vunpack.c.1.s8 %v37
    %v76 = vunpack.c.0.s8 %v38
    %v77 = vunpack.c.1.s8 %v38
    %v78 = vunpack.c.0.s8 %v39
    %v79 = vunpack.c.1.s8 %v39
    %v80 = vunpack.c.0.s8 %v40
    %v81 = vunpack.c.1.s8 %v40
    %v82 = vunpack.c.0.s8 %v41
    %v83 = vunpack.c.1.s8 %v41
    %v84 = vunpack.c.0.s8 %v42
    %v85 = vunpack.c.1.s8 %v42
    %v86 = vunpack.c.0.s8 %v43
    %v87 = vunpack.c.1.s8 %v43
    %v88 = vunpack.c.0.s8 %v44
    %v89 = vunpack.c.1.s8 %v44
    %v90 = vunpack.c.0.s8 %v45
    %v91 = vunpack.c.1.s8 %v45
    %v92 = vunpack.c.0.s8 %v46
    %v93 = vunpack.c.1.s8 %v46
    %v94 = vunpack.c.0.s8 %v47
    %v95 = vunpack.c.1.s8 %v47
    %v96 = vunpack.c.0.s8 %v48
    %v97 = vunpack.c.1.s8 %v48
    %v98 = vunpack.c.0.s8 %v49
    %v99 = vunpack.c.1.s8 %v49
    %v100 = vunpack.c.0.s8 %v50
    %v101 = vunpack.c.1.s8 %v50
    %v102 = vunpack.c.0.s8 %v51
    %v103 = vunpack.c.1.s8 %v51
    %v104 = vunpack.c.0.s8 %v52
    %v105 = vunpack.c.1.s8 %v52
    %v106 = vunpack.c.0.s8 %v53
    %v107 = vunpack.c.1.s8 %v53
    %v108 = vunpack.c.0.s8 %v54
    %v109 = vunpack.c.1.s8 %v54
    %v110 = vunpack.c.0.s8 %v55
    %v111 = vunpack.c.1.s8 %v55
    %v112 = vunpack.c.0.s8 %v56
    %v113 = vunpack.c.1.s8 %v56
    %v114 = vunpack.c.0.s8 %v57
    %v115 = vunpack.c.1.s8 %v57
    %v116 = vunpack.c.0.s8 %v58
    %v117 = vunpack.c.1.s8 %v58
    %v118 = vunpack.c.0.s8 %v59
    %v119 = vunpack.c.1.s8 %v59
    %v120 = vunpack.c.0.s8 %v60
    %v121 = vunpack.c.1.s8 %v60
    %v122 = vunpack.c.0.s8 %v61
    %v123 = vunpack.c.1.s8 %v61
    %v124 = vunpack.c.0.s8 %v62
    %v125 = vunpack.c.1.s8 %v62
    %v126 = vunpack.c.0.s8 %v63
    %v127 = vunpack.c.1.s8 %v63
    %v128 = vcvt.s32.f32 %v64
    %v129 = vcvt.s32.f32 %v65
    %v130 = vcvt.s32.f32 %v66
    %v131 = vcvt.s32.f32 %v67
    %v132 = vcvt.s32.f32 %v68
    %v133 = vcvt.s32.f32 %v69
    %v134 = vcvt.s32.f32 %v70
    %v135 = vcvt.s32.f32 %v71
    %v136 = vcvt.s32.f32 %v72
    %v137 = vcvt.s32.f32 %v73
    %v138 = vcvt.s32.f32 %v74
    %v139 = vcvt.s32.f32 %v75
    %v140 = vcvt.s32.f32 %v76
    %v141 = vcvt.s32.f32 %v77
    %v142 = vcvt.s32.f32 %v78
    %v143 = vcvt.s32.f32 %v79
    %v144 = vcvt.s32.f32 %v80
    %v145 = vcvt.s32.f32 %v81
    %v146 = vcvt.s32.f32 %v82
    %v147 = vcvt.s32.f32 %v83
    %v148 = vcvt.s32.f32 %v84
    %v149 = vcvt.s32.f32 %v85
    %v150 = vcvt.s32.f32 %v86
    %v151 = vcvt.s32.f32 %v87
    %v152 = vcvt.s32.f32 %v88
    %v153 = vcvt.s32.f32 %v89
    %v154 = vcvt.s32.f32 %v90
    %v155 = vcvt.s32.f32 %v91
    %v156 = vcvt.s32.f32 %v92
    %v157 = vcvt.s32.f32 %v93
    %v158 = vcvt.s32.f32 %v94
    %v159 = vcvt.s32.f32 %v95
    %v160 = vcvt.s32.f32 %v96
    %v161 = vcvt.s32.f32 %v97
    %v162 = vcvt.s32.f32 %v98
    %v163 = vcvt.s32.f32 %v99
    %v164 = vcvt.s32.f32 %v100
    %v165 = vcvt.s32.f32 %v101
    %v166 = vcvt.s32.f32 %v102
    %v167 = vcvt.s32.f32 %v103
    %v168 = vcvt.s32.f32 %v104
    %v169 = vcvt.s32.f32 %v105
    %v170 = vcvt.s32.f32 %v106
    %v171 = vcvt.s32.f32 %v107
    %v172 = vcvt.s32.f32 %v108
    %v173 = vcvt.s32.f32 %v109
    %v174 = vcvt.s32.f32 %v110
    %v175 = vcvt.s32.f32 %v111
    %v176 = vcvt.s32.f32 %v112
    %v177 = vcvt.s32.f32 %v113
    %v178 = vcvt.s32.f32 %v114
    %v179 = vcvt.s32.f32 %v115
    %v180 = vcvt.s32.f32 %v116
    %v181 = vcvt.s32.f32 %v117
    %v182 = vcvt.s32.f32 %v118
    %v183 = vcvt.s32.f32 %v119
    %v184 = vcvt.s32.f32 %v120
    %v185 = vcvt.s32.f32 %v121
    %v186 = vcvt.s32.f32 %v122
    %v187 = vcvt.s32.f32 %v123
    %v188 = vcvt.s32.f32 %v124
    %v189 = vcvt.s32.f32 %v125
    %v190 = vcvt.s32.f32 %v126
    %v191 = vcvt.s32.f32 %v127
    %v192 = vpack.c.bf16 %v130, %v128
    %v193 = vpack.c.bf16 %v131, %v129
    %v194 = vpack.c.bf16 %v134, %v132
    %v195 = vpack.c.bf16 %v135, %v133
    %v196 = vpack.c.bf16 %v138, %v136
    %v197 = vpack.c.bf16 %v139, %v137
    %v198 = vpack.c.bf16 %v142, %v140
    %v199 = vpack.c.bf16 %v143, %v141
    %v200 = vpack.c.bf16 %v146, %v144
    %v201 = vpack.c.bf16 %v147, %v145
    %v202 = vpack.c.bf16 %v150, %v148
    %v203 = vpack.c.bf16 %v151, %v149
    %v204 = vpack.c.bf16 %v154, %v152
    %v205 = vpack.c.bf16 %v155, %v153
    %v206 = vpack.c.bf16 %v158, %v156
    %v207 = vpack.c.bf16 %v159, %v157
    %v208 = vpack.c.bf16 %v162, %v160
    %v209 = vpack.c.bf16 %v163, %v161
    %v210 = vpack.c.bf16 %v166, %v164
    %v211 = vpack.c.bf16 %v167, %v165
    %v212 = vpack.c.bf16 %v170, %v168
    %v213 = vpack.c.bf16 %v171, %v169
    %v214 = vpack.c.bf16 %v174, %v172
    %v215 = vpack.c.bf16 %v175, %v173
    %v216 = vpack.c.bf16 %v178, %v176
    %v217 = vpack.c.bf16 %v179, %v177
    %v218 = vpack.c.bf16 %v182, %v180
    %v219 = vpack.c.bf16 %v183, %v181
    %v220 = vpack.c.bf16 %v186, %v184
    %v221 = vpack.c.bf16 %v187, %v185
    %v222 = vpack.c.bf16 %v190, %v188
    %v223 = vpack.c.bf16 %v191, %v189
    %v224 = vld [vmem:[%s1] sm:$0xf]
    %v225 = vld [vmem:[%s1 + $0x4] sm:$0xf]
    %v226 = vld [vmem:[%s1 + $0x8] sm:$0xf]
    %v227 = vld [vmem:[%s1 + $0xc] sm:$0xf]
    %v228 = vld [vmem:[%s1 + $0x10] sm:$0xf]
    %v229 = vld [vmem:[%s1 + $0x14] sm:$0xf]
    %v230 = vld [vmem:[%s1 + $0x18] sm:$0xf]
    %v231 = vld [vmem:[%s1 + $0x1c] sm:$0xf]
    %v232 = vld [vmem:[%s1 + $0x20] sm:$0xf]
    %v233 = vld [vmem:[%s1 + $0x24] sm:$0xf]
    %v234 = vld [vmem:[%s1 + $0x28] sm:$0xf]
    %v235 = vld [vmem:[%s1 + $0x2c] sm:$0xf]
    %v236 = vld [vmem:[%s1 + $0x30] sm:$0xf]
    %v237 = vld [vmem:[%s1 + $0x34] sm:$0xf]
    %v238 = vld [vmem:[%s1 + $0x38] sm:$0xf]
    %v239 = vld [vmem:[%s1 + $0x3c] sm:$0xf]
    %v240 = vld [vmem:[%s1 + $0x40] sm:$0xf]
    %v241 = vld [vmem:[%s1 + $0x44] sm:$0xf]
    %v242 = vld [vmem:[%s1 + $0x48] sm:$0xf]
    %v243 = vld [vmem:[%s1 + $0x4c] sm:$0xf]
    %v244 = vld [vmem:[%s1 + $0x50] sm:$0xf]
    %v245 = vld [vmem:[%s1 + $0x54] sm:$0xf]
    %v246 = vld [vmem:[%s1 + $0x58] sm:$0xf]
    %v247 = vld [vmem:[%s1 + $0x5c] sm:$0xf]
    %v248 = vld [vmem:[%s1 + $0x60] sm:$0xf]
    %v249 = vld [vmem:[%s1 + $0x64] sm:$0xf]
    %v250 = vld [vmem:[%s1 + $0x68] sm:$0xf]
    %v251 = vld [vmem:[%s1 + $0x6c] sm:$0xf]
    %v252 = vld [vmem:[%s1 + $0x70] sm:$0xf]
    %v253 = vld [vmem:[%s1 + $0x74] sm:$0xf]
    %v254 = vld [vmem:[%s1 + $0x78] sm:$0xf]
    %v255 = vld [vmem:[%s1 + $0x7c] sm:$0xf]
    %v288 = vunpack.c.l.b16 %v224
    %v289 = vunpack.c.l.b16 %v225
    %v290 = vunpack.c.l.b16 %v226
    %v291 = vunpack.c.l.b16 %v227
    %v292 = vunpack.c.l.b16 %v228
    %v293 = vunpack.c.l.b16 %v229
    %v294 = vunpack.c.l.b16 %v230
    %v295 = vunpack.c.l.b16 %v231
    %v296 = vunpack.c.l.b16 %v232
    %v297 = vunpack.c.l.b16 %v233
    %v298 = vunpack.c.l.b16 %v234
    %v299 = vunpack.c.l.b16 %v235
    %v300 = vunpack.c.l.b16 %v236
    %v301 = vunpack.c.l.b16 %v237
    %v302 = vunpack.c.l.b16 %v238
    %v303 = vunpack.c.l.b16 %v239
    %v304 = vunpack.c.l.b16 %v240
    %v305 = vunpack.c.l.b16 %v241
    %v306 = vunpack.c.l.b16 %v242
    %v307 = vunpack.c.l.b16 %v243
    %v308 = vunpack.c.l.b16 %v244
    %v309 = vunpack.c.l.b16 %v245
    %v310 = vunpack.c.l.b16 %v246
    %v311 = vunpack.c.l.b16 %v247
    %v312 = vunpack.c.l.b16 %v248
    %v313 = vunpack.c.l.b16 %v249
    %v314 = vunpack.c.l.b16 %v250
    %v315 = vunpack.c.l.b16 %v251
    %v316 = vunpack.c.l.b16 %v252
    %v317 = vunpack.c.l.b16 %v253
    %v318 = vunpack.c.l.b16 %v254
    %v319 = vunpack.c.l.b16 %v255
    %v320 = vpack.c.b16 %v289, %v288
    %v321 = vpack.c.b16 %v291, %v290
    %v322 = vpack.c.b16 %v293, %v292
    %v323 = vpack.c.b16 %v295, %v294
    %v324 = vpack.c.b16 %v297, %v296
    %v325 = vpack.c.b16 %v299, %v298
    %v326 = vpack.c.b16 %v301, %v300
    %v327 = vpack.c.b16 %v303, %v302
    %v328 = vpack.c.b16 %v305, %v304
    %v329 = vpack.c.b16 %v307, %v306
    %v330 = vpack.c.b16 %v309, %v308
    %v331 = vpack.c.b16 %v311, %v310
    %v332 = vpack.c.b16 %v313, %v312
    %v333 = vpack.c.b16 %v315, %v314
    %v334 = vpack.c.b16 %v317, %v316
    %v335 = vpack.c.b16 %v319, %v318
    %352 = vmatpush.bf16.msra.mxu0 %v327
    %353 = vmatpush.bf16.msra.mxu0 %v326
    %354 = vmatpush.bf16.msra.mxu0 %v325
    %355 = vmatpush.bf16.msra.mxu0 %v324
    %356 = vmatpush.bf16.msra.mxu0 %v323
    %357 = vmatpush.bf16.msra.mxu0 %v322
    %358 = vmatpush.bf16.msra.mxu0 %v321
    %359 = vmatpush.bf16.msra.mxu0 %v320
    %360 = vmatmul.bf16.gmra.mxu0 %v192
    %v361 = vpop.f32.mrf.mxu0
    %v362 = vadd.f32 0.0, %v361
    %v363 = vpop.f32.mrf.mxu0
    %v364 = vadd.f32 0.0, %v363
    %365 = vmatmul.bf16.gmra.mxu0 %v194
    %v366 = vpop.f32.mrf.mxu0
    %v367 = vadd.f32 0.0, %v366
    %v368 = vpop.f32.mrf.mxu0
    %v369 = vadd.f32 0.0, %v368
    %370 = vmatmul.bf16.gmra.mxu0 %v196
    %v371 = vpop.f32.mrf.mxu0
    %v372 = vadd.f32 0.0, %v371
    %v373 = vpop.f32.mrf.mxu0
    %v374 = vadd.f32 0.0, %v373
    %375 = vmatmul.bf16.gmra.mxu0 %v198
    %v376 = vpop.f32.mrf.mxu0
    %v377 = vadd.f32 0.0, %v376
    %v378 = vpop.f32.mrf.mxu0
    %v379 = vadd.f32 0.0, %v378
    %380 = vmatmul.bf16.gmra.mxu0 %v200
    %v381 = vpop.f32.mrf.mxu0
    %v382 = vadd.f32 0.0, %v381
    %v383 = vpop.f32.mrf.mxu0
    %v384 = vadd.f32 0.0, %v383
    %385 = vmatmul.bf16.gmra.mxu0 %v202
    %v386 = vpop.f32.mrf.mxu0
    %v387 = vadd.f32 0.0, %v386
    %v388 = vpop.f32.mrf.mxu0
    %v389 = vadd.f32 0.0, %v388
    %390 = vmatmul.bf16.gmra.mxu0 %v204
    %v391 = vpop.f32.mrf.mxu0
    %v392 = vadd.f32 0.0, %v391
    %v393 = vpop.f32.mrf.mxu0
    %v394 = vadd.f32 0.0, %v393
    %395 = vmatmul.bf16.gmra.mxu0 %v206
    %v396 = vpop.f32.mrf.mxu0
    %v397 = vadd.f32 0.0, %v396
    %v398 = vpop.f32.mrf.mxu0
    %v399 = vadd.f32 0.0, %v398
    %400 = vmatmul.bf16.gmra.mxu0 %v208
    %v401 = vpop.f32.mrf.mxu0
    %v402 = vadd.f32 0.0, %v401
    %v403 = vpop.f32.mrf.mxu0
    %v404 = vadd.f32 0.0, %v403
    %405 = vmatmul.bf16.gmra.mxu0 %v210
    %v406 = vpop.f32.mrf.mxu0
    %v407 = vadd.f32 0.0, %v406
    %v408 = vpop.f32.mrf.mxu0
    %v409 = vadd.f32 0.0, %v408
    %410 = vmatmul.bf16.gmra.mxu0 %v212
    %v411 = vpop.f32.mrf.mxu0
    %v412 = vadd.f32 0.0, %v411
    %v413 = vpop.f32.mrf.mxu0
    %v414 = vadd.f32 0.0, %v413
    %415 = vmatmul.bf16.gmra.mxu0 %v214
    %v416 = vpop.f32.mrf.mxu0
    %v417 = vadd.f32 0.0, %v416
    %v418 = vpop.f32.mrf.mxu0
    %v419 = vadd.f32 0.0, %v418
    %420 = vmatmul.bf16.gmra.mxu0 %v216
    %v421 = vpop.f32.mrf.mxu0
    %v422 = vadd.f32 0.0, %v421
    %v423 = vpop.f32.mrf.mxu0
    %v424 = vadd.f32 0.0, %v423
    %425 = vmatmul.bf16.gmra.mxu0 %v218
    %v426 = vpop.f32.mrf.mxu0
    %v427 = vadd.f32 0.0, %v426
    %v428 = vpop.f32.mrf.mxu0
    %v429 = vadd.f32 0.0, %v428
    %430 = vmatmul.bf16.gmra.mxu0 %v220
    %v431 = vpop.f32.mrf.mxu0
    %v432 = vadd.f32 0.0, %v431
    %v433 = vpop.f32.mrf.mxu0
    %v434 = vadd.f32 0.0, %v433
    %435 = vmatmul.bf16.gmra.mxu0 %v222
    %v436 = vpop.f32.mrf.mxu0
    %v437 = vadd.f32 0.0, %v436
    %v438 = vpop.f32.mrf.mxu0
    %v439 = vadd.f32 0.0, %v438
    %440 = vdwg.mxu0
    %441 = vmatpush.bf16.msra.mxu0 %v335
    %442 = vmatpush.bf16.msra.mxu0 %v334
    %443 = vmatpush.bf16.msra.mxu0 %v333
    %444 = vmatpush.bf16.msra.mxu0 %v332
    %445 = vmatpush.bf16.msra.mxu0 %v331
    %446 = vmatpush.bf16.msra.mxu0 %v330
    %447 = vmatpush.bf16.msra.mxu0 %v329
    %448 = vmatpush.bf16.msra.mxu0 %v328
    %449 = vmatmul.bf16.gmra.mxu0 %v193
    %v450 = vpop.f32.mrf.mxu0
    %v451 = vadd.f32 %v362, %v450
    %v452 = vpop.f32.mrf.mxu0
    %v453 = vadd.f32 %v364, %v452
    %454 = vmatmul.bf16.gmra.mxu0 %v195
    %v455 = vpop.f32.mrf.mxu0
    %v456 = vadd.f32 %v367, %v455
    %v457 = vpop.f32.mrf.mxu0
    %v458 = vadd.f32 %v369, %v457
    %459 = vmatmul.bf16.gmra.mxu0 %v197
    %v460 = vpop.f32.mrf.mxu0
    %v461 = vadd.f32 %v372, %v460
    %v462 = vpop.f32.mrf.mxu0
    %v463 = vadd.f32 %v374, %v462
    %464 = vmatmul.bf16.gmra.mxu0 %v199
    %v465 = vpop.f32.mrf.mxu0
    %v466 = vadd.f32 %v377, %v465
    %v467 = vpop.f32.mrf.mxu0
    %v468 = vadd.f32 %v379, %v467
    %469 = vmatmul.bf16.gmra.mxu0 %v201
    %v470 = vpop.f32.mrf.mxu0
    %v471 = vadd.f32 %v382, %v470
    %v472 = vpop.f32.mrf.mxu0
    %v473 = vadd.f32 %v384, %v472
    %474 = vmatmul.bf16.gmra.mxu0 %v203
    %v475 = vpop.f32.mrf.mxu0
    %v476 = vadd.f32 %v387, %v475
    %v477 = vpop.f32.mrf.mxu0
    %v478 = vadd.f32 %v389, %v477
    %479 = vmatmul.bf16.gmra.mxu0 %v205
    %v480 = vpop.f32.mrf.mxu0
    %v481 = vadd.f32 %v392, %v480
    %v482 = vpop.f32.mrf.mxu0
    %v483 = vadd.f32 %v394, %v482
    %484 = vmatmul.bf16.gmra.mxu0 %v207
    %v485 = vpop.f32.mrf.mxu0
    %v486 = vadd.f32 %v397, %v485
    %v487 = vpop.f32.mrf.mxu0
    %v488 = vadd.f32 %v399, %v487
    %489 = vmatmul.bf16.gmra.mxu0 %v209
    %v490 = vpop.f32.mrf.mxu0
    %v491 = vadd.f32 %v402, %v490
    %v492 = vpop.f32.mrf.mxu0
    %v493 = vadd.f32 %v404, %v492
    %494 = vmatmul.bf16.gmra.mxu0 %v211
    %v495 = vpop.f32.mrf.mxu0
    %v496 = vadd.f32 %v407, %v495
    %v497 = vpop.f32.mrf.mxu0
    %v498 = vadd.f32 %v409, %v497
    %499 = vmatmul.bf16.gmra.mxu0 %v213
    %v500 = vpop.f32.mrf.mxu0
    %v501 = vadd.f32 %v412, %v500
    %v502 = vpop.f32.mrf.mxu0
    %v503 = vadd.f32 %v414, %v502
    %504 = vmatmul.bf16.gmra.mxu0 %v215
    %v505 = vpop.f32.mrf.mxu0
    %v506 = vadd.f32 %v417, %v505
    %v507 = vpop.f32.mrf.mxu0
    %v508 = vadd.f32 %v419, %v507
    %509 = vmatmul.bf16.gmra.mxu0 %v217
    %v510 = vpop.f32.mrf.mxu0
    %v511 = vadd.f32 %v422, %v510
    %v512 = vpop.f32.mrf.mxu0
    %v513 = vadd.f32 %v424, %v512
    %514 = vmatmul.bf16.gmra.mxu0 %v219
    %v515 = vpop.f32.mrf.mxu0
    %v516 = vadd.f32 %v427, %v515
    %v517 = vpop.f32.mrf.mxu0
    %v518 = vadd.f32 %v429, %v517
    %519 = vmatmul.bf16.gmra.mxu0 %v221
    %v520 = vpop.f32.mrf.mxu0
    %v521 = vadd.f32 %v432, %v520
    %v522 = vpop.f32.mrf.mxu0
    %v523 = vadd.f32 %v434, %v522
    %524 = vmatmul.bf16.gmra.mxu0 %v223
    %v525 = vpop.f32.mrf.mxu0
    %v526 = vadd.f32 %v437, %v525
    %v527 = vpop.f32.mrf.mxu0
    %v528 = vadd.f32 %v439, %v527
    %529 = vdwg.mxu0
    %v530 = vld [vmem:[%s3] sm:$0xff]
    %v531 = vld [vmem:[%s3 + $0x8] sm:$0xff]
    %v532 = vld [vmem:[%s3 + $0x10] sm:$0xff]
    %v533 = vld [vmem:[%s3 + $0x18] sm:$0xff]
    %v534 = vld [vmem:[%s3 + $0x20] sm:$0xff]
    %v535 = vld [vmem:[%s3 + $0x28] sm:$0xff]
    %v536 = vld [vmem:[%s3 + $0x30] sm:$0xff]
    %v537 = vld [vmem:[%s3 + $0x38] sm:$0xff]
    %v538 = vld [vmem:[%s3 + $0x40] sm:$0xff]
    %v539 = vld [vmem:[%s3 + $0x48] sm:$0xff]
    %v540 = vld [vmem:[%s3 + $0x50] sm:$0xff]
    %v541 = vld [vmem:[%s3 + $0x58] sm:$0xff]
    %v542 = vld [vmem:[%s3 + $0x60] sm:$0xff]
    %v543 = vld [vmem:[%s3 + $0x68] sm:$0xff]
    %v544 = vld [vmem:[%s3 + $0x70] sm:$0xff]
    %v545 = vld [vmem:[%s3 + $0x78] sm:$0xff]
    %v546 = vld [vmem:[%s3 + $0x80] sm:$0xff]
    %v547 = vld [vmem:[%s3 + $0x88] sm:$0xff]
    %v548 = vld [vmem:[%s3 + $0x90] sm:$0xff]
    %v549 = vld [vmem:[%s3 + $0x98] sm:$0xff]
    %v550 = vld [vmem:[%s3 + $0xa0] sm:$0xff]
    %v551 = vld [vmem:[%s3 + $0xa8] sm:$0xff]
    %v552 = vld [vmem:[%s3 + $0xb0] sm:$0xff]
    %v553 = vld [vmem:[%s3 + $0xb8] sm:$0xff]
    %v554 = vld [vmem:[%s3 + $0xc0] sm:$0xff]
    %v555 = vld [vmem:[%s3 + $0xc8] sm:$0xff]
    %v556 = vld [vmem:[%s3 + $0xd0] sm:$0xff]
    %v557 = vld [vmem:[%s3 + $0xd8] sm:$0xff]
    %v558 = vld [vmem:[%s3 + $0xe0] sm:$0xff]
    %v559 = vld [vmem:[%s3 + $0xe8] sm:$0xff]
    %v560 = vld [vmem:[%s3 + $0xf0] sm:$0xff]
    %v561 = vld [vmem:[%s3 + $0xf8] sm:$0xff]
    %563 = vset.pattern.permute.xlu0 0
    %564 = vperm.xlu0 %563, %v530
    %v565 = vpop.permute.xlu0 %564
    %568 = vset.pattern.permute.xlu0 0
    %569 = vperm.xlu0 %568, %v531
    %v570 = vpop.permute.xlu0 %569
    %573 = vset.pattern.permute.xlu0 0
    %574 = vperm.xlu0 %573, %v532
    %v575 = vpop.permute.xlu0 %574
    %578 = vset.pattern.permute.xlu0 0
    %579 = vperm.xlu0 %578, %v533
    %v580 = vpop.permute.xlu0 %579
    %583 = vset.pattern.permute.xlu0 0
    %584 = vperm.xlu0 %583, %v534
    %v585 = vpop.permute.xlu0 %584
    %588 = vset.pattern.permute.xlu0 0
    %589 = vperm.xlu0 %588, %v535
    %v590 = vpop.permute.xlu0 %589
    %593 = vset.pattern.permute.xlu0 0
    %594 = vperm.xlu0 %593, %v536
    %v595 = vpop.permute.xlu0 %594
    %598 = vset.pattern.permute.xlu0 0
    %599 = vperm.xlu0 %598, %v537
    %v600 = vpop.permute.xlu0 %599
    %603 = vset.pattern.permute.xlu0 0
    %604 = vperm.xlu0 %603, %v538
    %v605 = vpop.permute.xlu0 %604
    %608 = vset.pattern.permute.xlu0 0
    %609 = vperm.xlu0 %608, %v539
    %v610 = vpop.permute.xlu0 %609
    %613 = vset.pattern.permute.xlu0 0
    %614 = vperm.xlu0 %613, %v540
    %v615 = vpop.permute.xlu0 %614
    %618 = vset.pattern.permute.xlu0 0
    %619 = vperm.xlu0 %618, %v541
    %v620 = vpop.permute.xlu0 %619
    %623 = vset.pattern.permute.xlu0 0
    %624 = vperm.xlu0 %623, %v542
    %v625 = vpop.permute.xlu0 %624
    %628 = vset.pattern.permute.xlu0 0
    %629 = vperm.xlu0 %628, %v543
    %v630 = vpop.permute.xlu0 %629
    %633 = vset.pattern.permute.xlu0 0
    %634 = vperm.xlu0 %633, %v544
    %v635 = vpop.permute.xlu0 %634
    %638 = vset.pattern.permute.xlu0 0
    %639 = vperm.xlu0 %638, %v545
    %v640 = vpop.permute.xlu0 %639
    %643 = vset.pattern.permute.xlu0 0
    %644 = vperm.xlu0 %643, %v546
    %v645 = vpop.permute.xlu0 %644
    %648 = vset.pattern.permute.xlu0 0
    %649 = vperm.xlu0 %648, %v547
    %v650 = vpop.permute.xlu0 %649
    %653 = vset.pattern.permute.xlu0 0
    %654 = vperm.xlu0 %653, %v548
    %v655 = vpop.permute.xlu0 %654
    %658 = vset.pattern.permute.xlu0 0
    %659 = vperm.xlu0 %658, %v549
    %v660 = vpop.permute.xlu0 %659
    %663 = vset.pattern.permute.xlu0 0
    %664 = vperm.xlu0 %663, %v550
    %v665 = vpop.permute.xlu0 %664
    %668 = vset.pattern.permute.xlu0 0
    %669 = vperm.xlu0 %668, %v551
    %v670 = vpop.permute.xlu0 %669
    %673 = vset.pattern.permute.xlu0 0
    %674 = vperm.xlu0 %673, %v552
    %v675 = vpop.permute.xlu0 %674
    %678 = vset.pattern.permute.xlu0 0
    %679 = vperm.xlu0 %678, %v553
    %v680 = vpop.permute.xlu0 %679
    %683 = vset.pattern.permute.xlu0 0
    %684 = vperm.xlu0 %683, %v554
    %v685 = vpop.permute.xlu0 %684
    %688 = vset.pattern.permute.xlu0 0
    %689 = vperm.xlu0 %688, %v555
    %v690 = vpop.permute.xlu0 %689
    %693 = vset.pattern.permute.xlu0 0
    %694 = vperm.xlu0 %693, %v556
    %v695 = vpop.permute.xlu0 %694
    %698 = vset.pattern.permute.xlu0 0
    %699 = vperm.xlu0 %698, %v557
    %v700 = vpop.permute.xlu0 %699
    %703 = vset.pattern.permute.xlu0 0
    %704 = vperm.xlu0 %703, %v558
    %v705 = vpop.permute.xlu0 %704
    %708 = vset.pattern.permute.xlu0 0
    %709 = vperm.xlu0 %708, %v559
    %v710 = vpop.permute.xlu0 %709
    %713 = vset.pattern.permute.xlu0 0
    %714 = vperm.xlu0 %713, %v560
    %v715 = vpop.permute.xlu0 %714
    %718 = vset.pattern.permute.xlu0 0
    %719 = vperm.xlu0 %718, %v561
    %v720 = vpop.permute.xlu0 %719
    %v722 = vmul.f32 %v565, %v451
    %v723 = vmul.f32 %v570, %v453
    %v724 = vmul.f32 %v575, %v456
    %v725 = vmul.f32 %v580, %v458
    %v726 = vmul.f32 %v585, %v461
    %v727 = vmul.f32 %v590, %v463
    %v728 = vmul.f32 %v595, %v466
    %v729 = vmul.f32 %v600, %v468
    %v730 = vmul.f32 %v605, %v471
    %v731 = vmul.f32 %v610, %v473
    %v732 = vmul.f32 %v615, %v476
    %v733 = vmul.f32 %v620, %v478
    %v734 = vmul.f32 %v625, %v481
    %v735 = vmul.f32 %v630, %v483
    %v736 = vmul.f32 %v635, %v486
    %v737 = vmul.f32 %v640, %v488
    %v738 = vmul.f32 %v645, %v491
    %v739 = vmul.f32 %v650, %v493
    %v740 = vmul.f32 %v655, %v496
    %v741 = vmul.f32 %v660, %v498
    %v742 = vmul.f32 %v665, %v501
    %v743 = vmul.f32 %v670, %v503
    %v744 = vmul.f32 %v675, %v506
    %v745 = vmul.f32 %v680, %v508
    %v746 = vmul.f32 %v685, %v511
    %v747 = vmul.f32 %v690, %v513
    %v748 = vmul.f32 %v695, %v516
    %v749 = vmul.f32 %v700, %v518
    %v750 = vmul.f32 %v705, %v521
    %v751 = vmul.f32 %v710, %v523
    %v752 = vmul.f32 %v715, %v526
    %v753 = vmul.f32 %v720, %v528
    %v754 = vld [vmem:[%s2] sm:$0x1]
    %v756 = vperm.slane %v754, 0
    %v758 = vadd.f32 %v722, %v756
    %v759 = vadd.f32 %v723, %v756
    %v760 = vadd.f32 %v724, %v756
    %v761 = vadd.f32 %v725, %v756
    %v762 = vadd.f32 %v726, %v756
    %v763 = vadd.f32 %v727, %v756
    %v764 = vadd.f32 %v728, %v756
    %v765 = vadd.f32 %v729, %v756
    %v766 = vadd.f32 %v730, %v756
    %v767 = vadd.f32 %v731, %v756
    %v768 = vadd.f32 %v732, %v756
    %v769 = vadd.f32 %v733, %v756
    %v770 = vadd.f32 %v734, %v756
    %v771 = vadd.f32 %v735, %v756
    %v772 = vadd.f32 %v736, %v756
    %v773 = vadd.f32 %v737, %v756
    %v774 = vadd.f32 %v738, %v756
    %v775 = vadd.f32 %v739, %v756
    %v776 = vadd.f32 %v740, %v756
    %v777 = vadd.f32 %v741, %v756
    %v778 = vadd.f32 %v742, %v756
    %v779 = vadd.f32 %v743, %v756
    %v780 = vadd.f32 %v744, %v756
    %v781 = vadd.f32 %v745, %v756
    %v782 = vadd.f32 %v746, %v756
    %v783 = vadd.f32 %v747, %v756
    %v784 = vadd.f32 %v748, %v756
    %v785 = vadd.f32 %v749, %v756
    %v786 = vadd.f32 %v750, %v756
    %v787 = vadd.f32 %v751, %v756
    %v788 = vadd.f32 %v752, %v756
    %v789 = vadd.f32 %v753, %v756
    %v790 = vmax.f32 %v758, 0.0
    %v791 = vmax.f32 %v759, 0.0
    %v792 = vmax.f32 %v760, 0.0
    %v793 = vmax.f32 %v761, 0.0
    %v794 = vmax.f32 %v762, 0.0
    %v795 = vmax.f32 %v763, 0.0
    %v796 = vmax.f32 %v764, 0.0
    %v797 = vmax.f32 %v765, 0.0
    %v798 = vmax.f32 %v766, 0.0
    %v799 = vmax.f32 %v767, 0.0
    %v800 = vmax.f32 %v768, 0.0
    %v801 = vmax.f32 %v769, 0.0
    %v802 = vmax.f32 %v770, 0.0
    %v803 = vmax.f32 %v771, 0.0
    %v804 = vmax.f32 %v772, 0.0
    %v805 = vmax.f32 %v773, 0.0
    %v806 = vmax.f32 %v774, 0.0
    %v807 = vmax.f32 %v775, 0.0
    %v808 = vmax.f32 %v776, 0.0
    %v809 = vmax.f32 %v777, 0.0
    %v810 = vmax.f32 %v778, 0.0
    %v811 = vmax.f32 %v779, 0.0
    %v812 = vmax.f32 %v780, 0.0
    %v813 = vmax.f32 %v781, 0.0
    %v814 = vmax.f32 %v782, 0.0
    %v815 = vmax.f32 %v783, 0.0
    %v816 = vmax.f32 %v784, 0.0
    %v817 = vmax.f32 %v785, 0.0
    %v818 = vmax.f32 %v786, 0.0
    %v819 = vmax.f32 %v787, 0.0
    %v820 = vmax.f32 %v788, 0.0
    %v821 = vmax.f32 %v789, 0.0
    %v822 = vld [vmem:[#allocation2] sm:$0x3]
    %v823 = vld [vmem:[%s4] sm:$0x3]
    %v824 = vpack.c.bf16 %v791, %v790
    %v825 = vpack.c.bf16 %v793, %v792
    %v826 = vpack.c.bf16 %v795, %v794
    %v827 = vpack.c.bf16 %v797, %v796
    %v828 = vpack.c.bf16 %v799, %v798
    %v829 = vpack.c.bf16 %v801, %v800
    %v830 = vpack.c.bf16 %v803, %v802
    %v831 = vpack.c.bf16 %v805, %v804
    %v832 = vpack.c.bf16 %v807, %v806
    %v833 = vpack.c.bf16 %v809, %v808
    %v834 = vpack.c.bf16 %v811, %v810
    %v835 = vpack.c.bf16 %v813, %v812
    %v836 = vpack.c.bf16 %v815, %v814
    %v837 = vpack.c.bf16 %v817, %v816
    %v838 = vpack.c.bf16 %v819, %v818
    %v839 = vpack.c.bf16 %v821, %v820
    %841 = vst [vmem:[#allocation1] ss:$9 sm:$0xff] %v823
    %v842 = vld [vmem:[#allocation1] sm:$0xff]
    %v843 = vld [vmem:[#allocation1 + $0x9] sm:$0xff]
    %846 = vmatpush.bf16.msra.mxu0 %v831
    %847 = vmatpush.bf16.msra.mxu0 %v830
    %848 = vmatpush.bf16.msra.mxu0 %v829
    %849 = vmatpush.bf16.msra.mxu0 %v828
    %850 = vmatpush.bf16.msra.mxu0 %v827
    %851 = vmatpush.bf16.msra.mxu0 %v826
    %852 = vmatpush.bf16.msra.mxu0 %v825
    %853 = vmatpush.bf16.msra.mxu0 %v824
    %854 = vmatmul.bf16.gmra.mxu0 %v842
    %v855 = vpop.f32.mrf.mxu0
    %v856 = vadd.f32 0.0, %v855
    %v857 = vpop.f32.mrf.mxu0
    %858 = vdwg.mxu0
    %859 = vmatpush.bf16.msra.mxu0 %v839
    %860 = vmatpush.bf16.msra.mxu0 %v838
    %861 = vmatpush.bf16.msra.mxu0 %v837
    %862 = vmatpush.bf16.msra.mxu0 %v836
    %863 = vmatpush.bf16.msra.mxu0 %v835
    %864 = vmatpush.bf16.msra.mxu0 %v834
    %865 = vmatpush.bf16.msra.mxu0 %v833
    %866 = vmatpush.bf16.msra.mxu0 %v832
    %867 = vmatmul.bf16.gmra.mxu0 %v843
    %v868 = vpop.f32.mrf.mxu0
    %v869 = vadd.f32 %v856, %v868
    %v870 = vpop.f32.mrf.mxu0
    %871 = vdwg.mxu0
    %v872 = vadd.f32 %v822, %v869
    %873 = vst [vmem:[#allocation2] sm:$0x3] %v872
    // Predicated region
    $region34: #{gcn_forward.3} parent=1 // pred_check
      %p874 = pneg %p27
    $region35: #{gcn_forward.3} parent=1 // pred_check_branch
      %876 = sbr.rel (%p874) target = $region37
    $region36: #{gcn_forward.3} parent=1 // pred_region
      %v877 = vld [vmem:[#allocation2] sm:$0x3]
      %v878 = vpack.c.bf16 %v877, %v877
      %v879 = vld [vmem:[%s5] sm:$0xf]
      %v880 = vld [vmem:[%s5 + $0x4] sm:$0xf]
      %v881 = vld [vmem:[%s5 + $0x8] sm:$0xf]
      %v882 = vld [vmem:[%s5 + $0xc] sm:$0xf]
      %v883 = vld [vmem:[%s5 + $0x10] sm:$0xf]
      %v884 = vld [vmem:[%s5 + $0x14] sm:$0xf]
      %v885 = vld [vmem:[%s5 + $0x18] sm:$0xf]
      %v886 = vld [vmem:[%s5 + $0x1c] sm:$0xf]
      %v887 = vld [vmem:[%s5 + $0x20] sm:$0xf]
      %v888 = vld [vmem:[%s5 + $0x24] sm:$0xf]
      %v889 = vld [vmem:[%s5 + $0x28] sm:$0xf]
      %v890 = vld [vmem:[%s5 + $0x2c] sm:$0xf]
      %v891 = vld [vmem:[%s5 + $0x30] sm:$0xf]
      %v892 = vld [vmem:[%s5 + $0x34] sm:$0xf]
      %v893 = vld [vmem:[%s5 + $0x38] sm:$0xf]
      %v894 = vld [vmem:[%s5 + $0x3c] sm:$0xf]
      %v895 = vld [vmem:[%s6] sm:$0x1]
      %v897 = vperm.slane %v895, 0
      %v915 = vunpack.c.l.b16 %v879
      %v916 = vunpack.c.l.b16 %v880
      %v917 = vunpack.c.l.b16 %v881
      %v918 = vunpack.c.l.b16 %v882
      %v919 = vunpack.c.l.b16 %v883
      %v920 = vunpack.c.l.b16 %v884
      %v921 = vunpack.c.l.b16 %v885
      %v922 = vunpack.c.l.b16 %v886
      %v923 = vunpack.c.l.b16 %v887
      %v924 = vunpack.c.l.b16 %v888
      %v925 = vunpack.c.l.b16 %v889
      %v926 = vunpack.c.l.b16 %v890
      %v927 = vunpack.c.l.b16 %v891
      %v928 = vunpack.c.l.b16 %v892
      %v929 = vunpack.c.l.b16 %v893
      %v930 = vunpack.c.l.b16 %v894
      %v931 = vpack.c.b16 %v916, %v915
      %v932 = vpack.c.b16 %v918, %v917
      %v933 = vpack.c.b16 %v920, %v919
      %v934 = vpack.c.b16 %v922, %v921
      %v935 = vpack.c.b16 %v924, %v923
      %v936 = vpack.c.b16 %v926, %v925
      %v937 = vpack.c.b16 %v928, %v927
      %v938 = vpack.c.b16 %v930, %v929
      %947 = vmatpush.bf16.msra.mxu0 %v938
      %948 = vmatpush.bf16.msra.mxu0 %v937
      %949 = vmatpush.bf16.msra.mxu0 %v936
      %950 = vmatpush.bf16.msra.mxu0 %v935
      %951 = vmatpush.bf16.msra.mxu0 %v934
      %952 = vmatpush.bf16.msra.mxu0 %v933
      %953 = vmatpush.bf16.msra.mxu0 %v932
      %954 = vmatpush.bf16.msra.mxu0 %v931
      %955 = vmatmul.bf16.gmra.mxu0 %v878
      %v956 = vpop.f32.mrf.mxu0
      %v957 = vadd.f32 %v897, %v956
      %v958 = vpop.f32.mrf.mxu0
      %959 = vdwg.mxu0
      %vm960 = vcmask 17408
      %v961 = vsel %vm960, %v957, -inf
      %962 = vmax.xlane.f32.xlu0 %v961
      %v963 = vpop.xlane.xlu0 %962
      %v964 = vsub.f32 %v957, %v963
      %v965 = vmul.f32 %v964, 1.442695
      %v966 = vpow.pop %v965
      %v967 = vsel %vm960, %v966, 0.0
      %968 = vadd.xlane.f32.xlu0 %v967
      %v969 = vpop.xlane.xlu0 %968
      %v970 = vlog2.pop %v969
      %v971 = vmul.f32 %v970, 0.6931472
      %v972 = vadd.f32 %v963, %v971
      %v973 = vsub.f32 %v957, %v972
      %974 = vst.msk [vmem:[#allocation3] sm:$0x3] %vm960, %v973
    $region37: #{gcn_forward.3} parent=1 // pred_fallthru
      _
    // Predicated region
    $region38: #{gcn_forward.3} parent=1 // pred_check
      _
    $region39: #{gcn_forward.3} parent=1 // pred_check_branch
      %976 = sbr.rel (0) target = $region41
    $region40: #{gcn_forward.3} parent=1 // pred_region
      %978 = vsyncadd [#allocation4], 0
      %s980 = sshll.u32 [#allocation3], 4
      %s981 = int_to_ptr.vmem [resolvable:$true] %s980
      %s982 = sshll.u32 %s7, 4
      %s983 = int_to_ptr.hbm [resolvable:$true] %s982
      %985 = dma.vmem_to_hbm [thread:$0]  %s981, 32, %s983, [#allocation4]
    $region41: #{gcn_forward.3} parent=1 // pred_fallthru
      _
    // Predicated region
    $region42: #{gcn_forward.3} parent=1 // pred_check
      _
    $region43: #{gcn_forward.3} parent=1 // pred_check_branch
      %987 = sbr.rel (0) target = $region45
    $region44: #{gcn_forward.3} parent=1 // pred_region
      %989 = dma.done [#allocation4], 32
    $region45: #{gcn_forward.3} parent=1 // pred_fallthru
      _
    %990 = vsyncpa [#allocation4], 1

// kernel: gcn_forward.2
$region0: #{gcn_forward.2}
  #allocation0 [shape = 'u32[]', space=smem, size = 0x4, offset = 0x4, fixed_abs, tag = 'smem constant byte address 0x4 - core index']
  #allocation1 [shape = 'u32[72,128]{1,0:T(1,128)}', space=vmem, size = 0x9000, scoped, tag = 'internal scratch']
  #allocation2 [shape = 'bf16[256,64]{1,0:T(8,128)(2,1)}', space=vmem, size = 0x10000, scoped, tag = 'scratch operand']
  %s0 = inlined_call_operand.vmem [shape: s8[256,256], index: 0, kind: input, shape index: {}]
  %s1 = inlined_call_operand.vmem [shape: bf16[256,16], index: 1, kind: input, shape index: {}]
  %s2 = inlined_call_operand.vmem [shape: bf16[16,64], index: 2, kind: input, shape index: {}]
  %s3 = inlined_call_operand.vmem [shape: f32[1,64], index: 3, kind: input, shape index: {}]
  %s4 = inlined_call_operand.vmem [shape: bf16[64,128], index: 4, kind: input, shape index: {}]
  %s5 = inlined_call_operand.vmem [shape: f32[256,1], index: 5, kind: input, shape index: {}]
  %s6 = inlined_call_operand.vmem [shape: bf16[256,128], index: 6, kind: output, shape index: {}]
  %s7 = sld [smem:[#allocation0]]
  $region38: #{gcn_forward.2} parent=0
    _
  %s9 = ssub.s32 1, %s7
  %s10 = scalar_select 0, %s9, %s7
  // Predicated region
  $region2: #{gcn_forward.2} parent=0 // pred_check
    _
  $region3: #{gcn_forward.2} parent=0 // pred_check_branch
    %12 = sbr.rel (0) target = $region5
  $region4: #{gcn_forward.2} parent=0 // pred_region
    _
  $region5: #{gcn_forward.2} parent=0 // pred_fallthru
    _
  // Predicated region
  $region6: #{gcn_forward.2} parent=0 // pred_check
    _
  $region7: #{gcn_forward.2} parent=0 // pred_check_branch
    %14 = sbr.rel (0) target = $region9
  $region8: #{gcn_forward.2} parent=0 // pred_region
    _
  $region9: #{gcn_forward.2} parent=0 // pred_fallthru
    _
  // Predicated region
  $region10: #{gcn_forward.2} parent=0 // pred_check
    _
  $region11: #{gcn_forward.2} parent=0 // pred_check_branch
    %16 = sbr.rel (0) target = $region13
  $region12: #{gcn_forward.2} parent=0 // pred_region
    _
  $region13: #{gcn_forward.2} parent=0 // pred_fallthru
    _
  // Predicated region
  $region14: #{gcn_forward.2} parent=0 // pred_check
    _
  $region15: #{gcn_forward.2} parent=0 // pred_check_branch
    %18 = sbr.rel (0) target = $region17
  $region16: #{gcn_forward.2} parent=0 // pred_region
    _
  $region17: #{gcn_forward.2} parent=0 // pred_fallthru
    _
  // Predicated region
  $region18: #{gcn_forward.2} parent=0 // pred_check
    _
  $region19: #{gcn_forward.2} parent=0 // pred_check_branch
    %20 = sbr.rel (0) target = $region21
  $region20: #{gcn_forward.2} parent=0 // pred_region
    _
  $region21: #{gcn_forward.2} parent=0 // pred_fallthru
    _
  // Predicated region
  $region22: #{gcn_forward.2} parent=0 // pred_check
    _
  $region23: #{gcn_forward.2} parent=0 // pred_check_branch
    %22 = sbr.rel (0) target = $region25
  $region24: #{gcn_forward.2} parent=0 // pred_region
    _
  $region25: #{gcn_forward.2} parent=0 // pred_fallthru
    _
  %p24 = scmp.eq.s32.totalorder 0, 0
  // Predicated region
  $region26: #{gcn_forward.2} parent=0 // pred_check
    %p25 = pneg %p24
  $region27: #{gcn_forward.2} parent=0 // pred_check_branch
    %27 = sbr.rel (%p25) target = $region29
  $region28: #{gcn_forward.2} parent=0 // pred_region
    %v28 = vld [vmem:[%s1] sm:$0xf]
    %v29 = vld [vmem:[%s1 + $0x4] sm:$0xf]
    %v30 = vld [vmem:[%s1 + $0x8] sm:$0xf]
    %v31 = vld [vmem:[%s1 + $0xc] sm:$0xf]
    %v32 = vld [vmem:[%s1 + $0x10] sm:$0xf]
    %v33 = vld [vmem:[%s1 + $0x14] sm:$0xf]
    %v34 = vld [vmem:[%s1 + $0x18] sm:$0xf]
    %v35 = vld [vmem:[%s1 + $0x1c] sm:$0xf]
    %v36 = vld [vmem:[%s1 + $0x20] sm:$0xf]
    %v37 = vld [vmem:[%s1 + $0x24] sm:$0xf]
    %v38 = vld [vmem:[%s1 + $0x28] sm:$0xf]
    %v39 = vld [vmem:[%s1 + $0x2c] sm:$0xf]
    %v40 = vld [vmem:[%s1 + $0x30] sm:$0xf]
    %v41 = vld [vmem:[%s1 + $0x34] sm:$0xf]
    %v42 = vld [vmem:[%s1 + $0x38] sm:$0xf]
    %v43 = vld [vmem:[%s1 + $0x3c] sm:$0xf]
    %v44 = vld [vmem:[%s1 + $0x40] sm:$0xf]
    %v45 = vld [vmem:[%s1 + $0x44] sm:$0xf]
    %v46 = vld [vmem:[%s1 + $0x48] sm:$0xf]
    %v47 = vld [vmem:[%s1 + $0x4c] sm:$0xf]
    %v48 = vld [vmem:[%s1 + $0x50] sm:$0xf]
    %v49 = vld [vmem:[%s1 + $0x54] sm:$0xf]
    %v50 = vld [vmem:[%s1 + $0x58] sm:$0xf]
    %v51 = vld [vmem:[%s1 + $0x5c] sm:$0xf]
    %v52 = vld [vmem:[%s1 + $0x60] sm:$0xf]
    %v53 = vld [vmem:[%s1 + $0x64] sm:$0xf]
    %v54 = vld [vmem:[%s1 + $0x68] sm:$0xf]
    %v55 = vld [vmem:[%s1 + $0x6c] sm:$0xf]
    %v56 = vld [vmem:[%s1 + $0x70] sm:$0xf]
    %v57 = vld [vmem:[%s1 + $0x74] sm:$0xf]
    %v58 = vld [vmem:[%s1 + $0x78] sm:$0xf]
    %v59 = vld [vmem:[%s1 + $0x7c] sm:$0xf]
    %v60 = vld [vmem:[%s2] sm:$0xf]
    %v61 = vld [vmem:[%s2 + $0x4] sm:$0xf]
    %v94 = vunpack.c.l.b16 %v28
    %v95 = vunpack.c.l.b16 %v29
    %v96 = vunpack.c.l.b16 %v30
    %v97 = vunpack.c.l.b16 %v31
    %v98 = vunpack.c.l.b16 %v32
    %v99 = vunpack.c.l.b16 %v33
    %v100 = vunpack.c.l.b16 %v34
    %v101 = vunpack.c.l.b16 %v35
    %v102 = vunpack.c.l.b16 %v36
    %v103 = vunpack.c.l.b16 %v37
    %v104 = vunpack.c.l.b16 %v38
    %v105 = vunpack.c.l.b16 %v39
    %v106 = vunpack.c.l.b16 %v40
    %v107 = vunpack.c.l.b16 %v41
    %v108 = vunpack.c.l.b16 %v42
    %v109 = vunpack.c.l.b16 %v43
    %v110 = vunpack.c.l.b16 %v44
    %v111 = vunpack.c.l.b16 %v45
    %v112 = vunpack.c.l.b16 %v46
    %v113 = vunpack.c.l.b16 %v47
    %v114 = vunpack.c.l.b16 %v48
    %v115 = vunpack.c.l.b16 %v49
    %v116 = vunpack.c.l.b16 %v50
    %v117 = vunpack.c.l.b16 %v51
    %v118 = vunpack.c.l.b16 %v52
    %v119 = vunpack.c.l.b16 %v53
    %v120 = vunpack.c.l.b16 %v54
    %v121 = vunpack.c.l.b16 %v55
    %v122 = vunpack.c.l.b16 %v56
    %v123 = vunpack.c.l.b16 %v57
    %v124 = vunpack.c.l.b16 %v58
    %v125 = vunpack.c.l.b16 %v59
    %v126 = vpack.c.b16 %v95, %v94
    %v127 = vpack.c.b16 %v97, %v96
    %v128 = vpack.c.b16 %v99, %v98
    %v129 = vpack.c.b16 %v101, %v100
    %v130 = vpack.c.b16 %v103, %v102
    %v131 = vpack.c.b16 %v105, %v104
    %v132 = vpack.c.b16 %v107, %v106
    %v133 = vpack.c.b16 %v109, %v108
    %v134 = vpack.c.b16 %v111, %v110
    %v135 = vpack.c.b16 %v113, %v112
    %v136 = vpack.c.b16 %v115, %v114
    %v137 = vpack.c.b16 %v117, %v116
    %v138 = vpack.c.b16 %v119, %v118
    %v139 = vpack.c.b16 %v121, %v120
    %v140 = vpack.c.b16 %v123, %v122
    %v141 = vpack.c.b16 %v125, %v124
    %v144 = vunpack.c.l.b16 %v60
    %v145 = vunpack.c.l.b16 %v61
    %v146 = vpack.c.b16 %v145, %v144
    %vm148 = vcmask 130048
    %v150 = vsel %vm148, %v126, 0
    %v153 = vsel %vm148, %v127, 0
    %v156 = vsel %vm148, %v128, 0
    %v159 = vsel %vm148, %v129, 0
    %v162 = vsel %vm148, %v130, 0
    %v165 = vsel %vm148, %v131, 0
    %v168 = vsel %vm148, %v132, 0
    %v171 = vsel %vm148, %v133, 0
    %v174 = vsel %vm148, %v134, 0
    %v177 = vsel %vm148, %v135, 0
    %v180 = vsel %vm148, %v136, 0
    %v183 = vsel %vm148, %v137, 0
    %v186 = vsel %vm148, %v138, 0
    %v189 = vsel %vm148, %v139, 0
    %v192 = vsel %vm148, %v140, 0
    %v195 = vsel %vm148, %v141, 0
    %197 = vmatpush.bf16.msra.mxu0 0
    %198 = vmatpush.bf16.msra.mxu0 0
    %199 = vmatpush.bf16.msra.mxu0 0
    %200 = vmatpush.bf16.msra.mxu0 0
    %201 = vmatpush.bf16.msra.mxu0 0
    %202 = vmatpush.bf16.msra.mxu0 0
    %203 = vmatpush.bf16.msra.mxu0 0
    %204 = vmatpush.bf16.msra.mxu0 %v146
    %205 = vmatmul.bf16.gmra.mxu0 %v150
    %v206 = vpop.f32.mrf.mxu0
    %v207 = vadd.f32 0.0, %v206
    %v208 = vpop.f32.mrf.mxu0
    %v209 = vadd.f32 0.0, %v208
    %210 = vmatmul.bf16.gmra.mxu0 %v153
    %v211 = vpop.f32.mrf.mxu0
    %v212 = vadd.f32 0.0, %v211
    %v213 = vpop.f32.mrf.mxu0
    %v214 = vadd.f32 0.0, %v213
    %215 = vmatmul.bf16.gmra.mxu0 %v156
    %v216 = vpop.f32.mrf.mxu0
    %v217 = vadd.f32 0.0, %v216
    %v218 = vpop.f32.mrf.mxu0
    %v219 = vadd.f32 0.0, %v218
    %220 = vmatmul.bf16.gmra.mxu0 %v159
    %v221 = vpop.f32.mrf.mxu0
    %v222 = vadd.f32 0.0, %v221
    %v223 = vpop.f32.mrf.mxu0
    %v224 = vadd.f32 0.0, %v223
    %225 = vmatmul.bf16.gmra.mxu0 %v162
    %v226 = vpop.f32.mrf.mxu0
    %v227 = vadd.f32 0.0, %v226
    %v228 = vpop.f32.mrf.mxu0
    %v229 = vadd.f32 0.0, %v228
    %230 = vmatmul.bf16.gmra.mxu0 %v165
    %v231 = vpop.f32.mrf.mxu0
    %v232 = vadd.f32 0.0, %v231
    %v233 = vpop.f32.mrf.mxu0
    %v234 = vadd.f32 0.0, %v233
    %235 = vmatmul.bf16.gmra.mxu0 %v168
    %v236 = vpop.f32.mrf.mxu0
    %v237 = vadd.f32 0.0, %v236
    %v238 = vpop.f32.mrf.mxu0
    %v239 = vadd.f32 0.0, %v238
    %240 = vmatmul.bf16.gmra.mxu0 %v171
    %v241 = vpop.f32.mrf.mxu0
    %v242 = vadd.f32 0.0, %v241
    %v243 = vpop.f32.mrf.mxu0
    %v244 = vadd.f32 0.0, %v243
    %245 = vmatmul.bf16.gmra.mxu0 %v174
    %v246 = vpop.f32.mrf.mxu0
    %v247 = vadd.f32 0.0, %v246
    %v248 = vpop.f32.mrf.mxu0
    %v249 = vadd.f32 0.0, %v248
    %250 = vmatmul.bf16.gmra.mxu0 %v177
    %v251 = vpop.f32.mrf.mxu0
    %v252 = vadd.f32 0.0, %v251
    %v253 = vpop.f32.mrf.mxu0
    %v254 = vadd.f32 0.0, %v253
    %255 = vmatmul.bf16.gmra.mxu0 %v180
    %v256 = vpop.f32.mrf.mxu0
    %v257 = vadd.f32 0.0, %v256
    %v258 = vpop.f32.mrf.mxu0
    %v259 = vadd.f32 0.0, %v258
    %260 = vmatmul.bf16.gmra.mxu0 %v183
    %v261 = vpop.f32.mrf.mxu0
    %v262 = vadd.f32 0.0, %v261
    %v263 = vpop.f32.mrf.mxu0
    %v264 = vadd.f32 0.0, %v263
    %265 = vmatmul.bf16.gmra.mxu0 %v186
    %v266 = vpop.f32.mrf.mxu0
    %v267 = vadd.f32 0.0, %v266
    %v268 = vpop.f32.mrf.mxu0
    %v269 = vadd.f32 0.0, %v268
    %270 = vmatmul.bf16.gmra.mxu0 %v189
    %v271 = vpop.f32.mrf.mxu0
    %v272 = vadd.f32 0.0, %v271
    %v273 = vpop.f32.mrf.mxu0
    %v274 = vadd.f32 0.0, %v273
    %275 = vmatmul.bf16.gmra.mxu0 %v192
    %v276 = vpop.f32.mrf.mxu0
    %v277 = vadd.f32 0.0, %v276
    %v278 = vpop.f32.mrf.mxu0
    %v279 = vadd.f32 0.0, %v278
    %280 = vmatmul.bf16.gmra.mxu0 %v195
    %v281 = vpop.f32.mrf.mxu0
    %v282 = vadd.f32 0.0, %v281
    %v283 = vpop.f32.mrf.mxu0
    %v284 = vadd.f32 0.0, %v283
    %285 = vdwg.mxu0
    %v286 = vpack.c.bf16 %v207, %v207
    %v287 = vpack.c.bf16 %v209, %v209
    %v288 = vpack.c.bf16 %v212, %v212
    %v289 = vpack.c.bf16 %v214, %v214
    %v290 = vpack.c.bf16 %v217, %v217
    %v291 = vpack.c.bf16 %v219, %v219
    %v292 = vpack.c.bf16 %v222, %v222
    %v293 = vpack.c.bf16 %v224, %v224
    %v294 = vpack.c.bf16 %v227, %v227
    %v295 = vpack.c.bf16 %v229, %v229
    %v296 = vpack.c.bf16 %v232, %v232
    %v297 = vpack.c.bf16 %v234, %v234
    %v298 = vpack.c.bf16 %v237, %v237
    %v299 = vpack.c.bf16 %v239, %v239
    %v300 = vpack.c.bf16 %v242, %v242
    %v301 = vpack.c.bf16 %v244, %v244
    %v302 = vpack.c.bf16 %v247, %v247
    %v303 = vpack.c.bf16 %v249, %v249
    %v304 = vpack.c.bf16 %v252, %v252
    %v305 = vpack.c.bf16 %v254, %v254
    %v306 = vpack.c.bf16 %v257, %v257
    %v307 = vpack.c.bf16 %v259, %v259
    %v308 = vpack.c.bf16 %v262, %v262
    %v309 = vpack.c.bf16 %v264, %v264
    %v310 = vpack.c.bf16 %v267, %v267
    %v311 = vpack.c.bf16 %v269, %v269
    %v312 = vpack.c.bf16 %v272, %v272
    %v313 = vpack.c.bf16 %v274, %v274
    %v314 = vpack.c.bf16 %v277, %v277
    %v315 = vpack.c.bf16 %v279, %v279
    %v316 = vpack.c.bf16 %v282, %v282
    %v317 = vpack.c.bf16 %v284, %v284
    %vm318 = vcmask 519168
    %319 = vst.msk [vmem:[#allocation2] sm:$0xf] %vm318, %v286
    %320 = vst.msk [vmem:[#allocation2 + $0x4] sm:$0xf] %vm318, %v287
    %321 = vst.msk [vmem:[#allocation2 + $0x8] sm:$0xf] %vm318, %v288
    %322 = vst.msk [vmem:[#allocation2 + $0xc] sm:$0xf] %vm318, %v289
    %323 = vst.msk [vmem:[#allocation2 + $0x10] sm:$0xf] %vm318, %v290
    %324 = vst.msk [vmem:[#allocation2 + $0x14] sm:$0xf] %vm318, %v291
    %325 = vst.msk [vmem:[#allocation2 + $0x18] sm:$0xf] %vm318, %v292
    %326 = vst.msk [vmem:[#allocation2 + $0x1c] sm:$0xf] %vm318, %v293
    %327 = vst.msk [vmem:[#allocation2 + $0x20] sm:$0xf] %vm318, %v294
    %328 = vst.msk [vmem:[#allocation2 + $0x24] sm:$0xf] %vm318, %v295
    %329 = vst.msk [vmem:[#allocation2 + $0x28] sm:$0xf] %vm318, %v296
    %330 = vst.msk [vmem:[#allocation2 + $0x2c] sm:$0xf] %vm318, %v297
    %331 = vst.msk [vmem:[#allocation2 + $0x30] sm:$0xf] %vm318, %v298
    %332 = vst.msk [vmem:[#allocation2 + $0x34] sm:$0xf] %vm318, %v299
    %333 = vst.msk [vmem:[#allocation2 + $0x38] sm:$0xf] %vm318, %v300
    %334 = vst.msk [vmem:[#allocation2 + $0x3c] sm:$0xf] %vm318, %v301
    %335 = vst.msk [vmem:[#allocation2 + $0x40] sm:$0xf] %vm318, %v302
    %336 = vst.msk [vmem:[#allocation2 + $0x44] sm:$0xf] %vm318, %v303
    %337 = vst.msk [vmem:[#allocation2 + $0x48] sm:$0xf] %vm318, %v304
    %338 = vst.msk [vmem:[#allocation2 + $0x4c] sm:$0xf] %vm318, %v305
    %339 = vst.msk [vmem:[#allocation2 + $0x50] sm:$0xf] %vm318, %v306
    %340 = vst.msk [vmem:[#allocation2 + $0x54] sm:$0xf] %vm318, %v307
    %341 = vst.msk [vmem:[#allocation2 + $0x58] sm:$0xf] %vm318, %v308
    %342 = vst.msk [vmem:[#allocation2 + $0x5c] sm:$0xf] %vm318, %v309
    %343 = vst.msk [vmem:[#allocation2 + $0x60] sm:$0xf] %vm318, %v310
    %344 = vst.msk [vmem:[#allocation2 + $0x64] sm:$0xf] %vm318, %v311
    %345 = vst.msk [vmem:[#allocation2 + $0x68] sm:$0xf] %vm318, %v312
    %346 = vst.msk [vmem:[#allocation2 + $0x6c] sm:$0xf] %vm318, %v313
    %347 = vst.msk [vmem:[#allocation2 + $0x70] sm:$0xf] %vm318, %v314
    %348 = vst.msk [vmem:[#allocation2 + $0x74] sm:$0xf] %vm318, %v315
    %349 = vst.msk [vmem:[#allocation2 + $0x78] sm:$0xf] %vm318, %v316
    %350 = vst.msk [vmem:[#allocation2 + $0x7c] sm:$0xf] %vm318, %v317
  $region29: #{gcn_forward.2} parent=0 // pred_fallthru
    _
  %v351 = vld [vmem:[%s0] sm:$0xf]
  %v352 = vld [vmem:[%s0 + $0x4] sm:$0xf]
  %v353 = vld [vmem:[%s0 + $0x8] sm:$0xf]
  %v354 = vld [vmem:[%s0 + $0xc] sm:$0xf]
  %v355 = vld [vmem:[%s0 + $0x10] sm:$0xf]
  %v356 = vld [vmem:[%s0 + $0x14] sm:$0xf]
  %v357 = vld [vmem:[%s0 + $0x18] sm:$0xf]
  %v358 = vld [vmem:[%s0 + $0x1c] sm:$0xf]
  %v359 = vld [vmem:[%s0 + $0x20] sm:$0xf]
  %v360 = vld [vmem:[%s0 + $0x24] sm:$0xf]
  %v361 = vld [vmem:[%s0 + $0x28] sm:$0xf]
  %v362 = vld [vmem:[%s0 + $0x2c] sm:$0xf]
  %v363 = vld [vmem:[%s0 + $0x30] sm:$0xf]
  %v364 = vld [vmem:[%s0 + $0x34] sm:$0xf]
  %v365 = vld [vmem:[%s0 + $0x38] sm:$0xf]
  %v366 = vld [vmem:[%s0 + $0x3c] sm:$0xf]
  %v367 = vld [vmem:[%s0 + $0x40] sm:$0xf]
  %v368 = vld [vmem:[%s0 + $0x44] sm:$0xf]
  %v369 = vld [vmem:[%s0 + $0x48] sm:$0xf]
  %v370 = vld [vmem:[%s0 + $0x4c] sm:$0xf]
  %v371 = vld [vmem:[%s0 + $0x50] sm:$0xf]
  %v372 = vld [vmem:[%s0 + $0x54] sm:$0xf]
  %v373 = vld [vmem:[%s0 + $0x58] sm:$0xf]
  %v374 = vld [vmem:[%s0 + $0x5c] sm:$0xf]
  %v375 = vld [vmem:[%s0 + $0x60] sm:$0xf]
  %v376 = vld [vmem:[%s0 + $0x64] sm:$0xf]
  %v377 = vld [vmem:[%s0 + $0x68] sm:$0xf]
  %v378 = vld [vmem:[%s0 + $0x6c] sm:$0xf]
  %v379 = vld [vmem:[%s0 + $0x70] sm:$0xf]
  %v380 = vld [vmem:[%s0 + $0x74] sm:$0xf]
  %v381 = vld [vmem:[%s0 + $0x78] sm:$0xf]
  %v382 = vld [vmem:[%s0 + $0x7c] sm:$0xf]
  %v383 = vunpack.c.0.s8 %v351
  %v384 = vunpack.c.1.s8 %v351
  %v385 = vunpack.c.0.s8 %v352
  %v386 = vunpack.c.1.s8 %v352
  %v387 = vunpack.c.0.s8 %v353
  %v388 = vunpack.c.1.s8 %v353
  %v389 = vunpack.c.0.s8 %v354
  %v390 = vunpack.c.1.s8 %v354
  %v391 = vunpack.c.0.s8 %v355
  %v392 = vunpack.c.1.s8 %v355
  %v393 = vunpack.c.0.s8 %v356
  %v394 = vunpack.c.1.s8 %v356
  %v395 = vunpack.c.0.s8 %v357
  %v396 = vunpack.c.1.s8 %v357
  %v397 = vunpack.c.0.s8 %v358
  %v398 = vunpack.c.1.s8 %v358
  %v399 = vunpack.c.0.s8 %v359
  %v400 = vunpack.c.1.s8 %v359
  %v401 = vunpack.c.0.s8 %v360
  %v402 = vunpack.c.1.s8 %v360
  %v403 = vunpack.c.0.s8 %v361
  %v404 = vunpack.c.1.s8 %v361
  %v405 = vunpack.c.0.s8 %v362
  %v406 = vunpack.c.1.s8 %v362
  %v407 = vunpack.c.0.s8 %v363
  %v408 = vunpack.c.1.s8 %v363
  %v409 = vunpack.c.0.s8 %v364
  %v410 = vunpack.c.1.s8 %v364
  %v411 = vunpack.c.0.s8 %v365
  %v412 = vunpack.c.1.s8 %v365
  %v413 = vunpack.c.0.s8 %v366
  %v414 = vunpack.c.1.s8 %v366
  %v415 = vunpack.c.0.s8 %v367
  %v416 = vunpack.c.1.s8 %v367
  %v417 = vunpack.c.0.s8 %v368
  %v418 = vunpack.c.1.s8 %v368
  %v419 = vunpack.c.0.s8 %v369
  %v420 = vunpack.c.1.s8 %v369
  %v421 = vunpack.c.0.s8 %v370
  %v422 = vunpack.c.1.s8 %v370
  %v423 = vunpack.c.0.s8 %v371
  %v424 = vunpack.c.1.s8 %v371
  %v425 = vunpack.c.0.s8 %v372
  %v426 = vunpack.c.1.s8 %v372
  %v427 = vunpack.c.0.s8 %v373
  %v428 = vunpack.c.1.s8 %v373
  %v429 = vunpack.c.0.s8 %v374
  %v430 = vunpack.c.1.s8 %v374
  %v431 = vunpack.c.0.s8 %v375
  %v432 = vunpack.c.1.s8 %v375
  %v433 = vunpack.c.0.s8 %v376
  %v434 = vunpack.c.1.s8 %v376
  %v435 = vunpack.c.0.s8 %v377
  %v436 = vunpack.c.1.s8 %v377
  %v437 = vunpack.c.0.s8 %v378
  %v438 = vunpack.c.1.s8 %v378
  %v439 = vunpack.c.0.s8 %v379
  %v440 = vunpack.c.1.s8 %v379
  %v441 = vunpack.c.0.s8 %v380
  %v442 = vunpack.c.1.s8 %v380
  %v443 = vunpack.c.0.s8 %v381
  %v444 = vunpack.c.1.s8 %v381
  %v445 = vunpack.c.0.s8 %v382
  %v446 = vunpack.c.1.s8 %v382
  %v447 = vcvt.s32.f32 %v383
  %v448 = vcvt.s32.f32 %v384
  %v449 = vcvt.s32.f32 %v385
  %v450 = vcvt.s32.f32 %v386
  %v451 = vcvt.s32.f32 %v387
  %v452 = vcvt.s32.f32 %v388
  %v453 = vcvt.s32.f32 %v389
  %v454 = vcvt.s32.f32 %v390
  %v455 = vcvt.s32.f32 %v391
  %v456 = vcvt.s32.f32 %v392
  %v457 = vcvt.s32.f32 %v393
  %v458 = vcvt.s32.f32 %v394
  %v459 = vcvt.s32.f32 %v395
  %v460 = vcvt.s32.f32 %v396
  %v461 = vcvt.s32.f32 %v397
  %v462 = vcvt.s32.f32 %v398
  %v463 = vcvt.s32.f32 %v399
  %v464 = vcvt.s32.f32 %v400
  %v465 = vcvt.s32.f32 %v401
  %v466 = vcvt.s32.f32 %v402
  %v467 = vcvt.s32.f32 %v403
  %v468 = vcvt.s32.f32 %v404
  %v469 = vcvt.s32.f32 %v405
  %v470 = vcvt.s32.f32 %v406
  %v471 = vcvt.s32.f32 %v407
  %v472 = vcvt.s32.f32 %v408
  %v473 = vcvt.s32.f32 %v409
  %v474 = vcvt.s32.f32 %v410
  %v475 = vcvt.s32.f32 %v411
  %v476 = vcvt.s32.f32 %v412
  %v477 = vcvt.s32.f32 %v413
  %v478 = vcvt.s32.f32 %v414
  %v479 = vcvt.s32.f32 %v415
  %v480 = vcvt.s32.f32 %v416
  %v481 = vcvt.s32.f32 %v417
  %v482 = vcvt.s32.f32 %v418
  %v483 = vcvt.s32.f32 %v419
  %v484 = vcvt.s32.f32 %v420
  %v485 = vcvt.s32.f32 %v421
  %v486 = vcvt.s32.f32 %v422
  %v487 = vcvt.s32.f32 %v423
  %v488 = vcvt.s32.f32 %v424
  %v489 = vcvt.s32.f32 %v425
  %v490 = vcvt.s32.f32 %v426
  %v491 = vcvt.s32.f32 %v427
  %v492 = vcvt.s32.f32 %v428
  %v493 = vcvt.s32.f32 %v429
  %v494 = vcvt.s32.f32 %v430
  %v495 = vcvt.s32.f32 %v431
  %v496 = vcvt.s32.f32 %v432
  %v497 = vcvt.s32.f32 %v433
  %v498 = vcvt.s32.f32 %v434
  %v499 = vcvt.s32.f32 %v435
  %v500 = vcvt.s32.f32 %v436
  %v501 = vcvt.s32.f32 %v437
  %v502 = vcvt.s32.f32 %v438
  %v503 = vcvt.s32.f32 %v439
  %v504 = vcvt.s32.f32 %v440
  %v505 = vcvt.s32.f32 %v441
  %v506 = vcvt.s32.f32 %v442
  %v507 = vcvt.s32.f32 %v443
  %v508 = vcvt.s32.f32 %v444
  %v509 = vcvt.s32.f32 %v445
  %v510 = vcvt.s32.f32 %v446
  %v511 = vpack.c.bf16 %v449, %v447
  %v512 = vpack.c.bf16 %v450, %v448
  %v513 = vpack.c.bf16 %v453, %v451
  %v514 = vpack.c.bf16 %v454, %v452
  %v515 = vpack.c.bf16 %v457, %v455
  %v516 = vpack.c.bf16 %v458, %v456
  %v517 = vpack.c.bf16 %v461, %v459
  %v518 = vpack.c.bf16 %v462, %v460
  %v519 = vpack.c.bf16 %v465, %v463
  %v520 = vpack.c.bf16 %v466, %v464
  %v521 = vpack.c.bf16 %v469, %v467
  %v522 = vpack.c.bf16 %v470, %v468
  %v523 = vpack.c.bf16 %v473, %v471
  %v524 = vpack.c.bf16 %v474, %v472
  %v525 = vpack.c.bf16 %v477, %v475
  %v526 = vpack.c.bf16 %v478, %v476
  %v527 = vpack.c.bf16 %v481, %v479
  %v528 = vpack.c.bf16 %v482, %v480
  %v529 = vpack.c.bf16 %v485, %v483
  %v530 = vpack.c.bf16 %v486, %v484
  %v531 = vpack.c.bf16 %v489, %v487
  %v532 = vpack.c.bf16 %v490, %v488
  %v533 = vpack.c.bf16 %v493, %v491
  %v534 = vpack.c.bf16 %v494, %v492
  %v535 = vpack.c.bf16 %v497, %v495
  %v536 = vpack.c.bf16 %v498, %v496
  %v537 = vpack.c.bf16 %v501, %v499
  %v538 = vpack.c.bf16 %v502, %v500
  %v539 = vpack.c.bf16 %v505, %v503
  %v540 = vpack.c.bf16 %v506, %v504
  %v541 = vpack.c.bf16 %v509, %v507
  %v542 = vpack.c.bf16 %v510, %v508
  %v543 = vld [vmem:[#allocation2] sm:$0xf]
  %v544 = vld [vmem:[#allocation2 + $0x4] sm:$0xf]
  %v545 = vld [vmem:[#allocation2 + $0x8] sm:$0xf]
  %v546 = vld [vmem:[#allocation2 + $0xc] sm:$0xf]
  %v547 = vld [vmem:[#allocation2 + $0x10] sm:$0xf]
  %v548 = vld [vmem:[#allocation2 + $0x14] sm:$0xf]
  %v549 = vld [vmem:[#allocation2 + $0x18] sm:$0xf]
  %v550 = vld [vmem:[#allocation2 + $0x1c] sm:$0xf]
  %v551 = vld [vmem:[#allocation2 + $0x20] sm:$0xf]
  %v552 = vld [vmem:[#allocation2 + $0x24] sm:$0xf]
  %v553 = vld [vmem:[#allocation2 + $0x28] sm:$0xf]
  %v554 = vld [vmem:[#allocation2 + $0x2c] sm:$0xf]
  %v555 = vld [vmem:[#allocation2 + $0x30] sm:$0xf]
  %v556 = vld [vmem:[#allocation2 + $0x34] sm:$0xf]
  %v557 = vld [vmem:[#allocation2 + $0x38] sm:$0xf]
  %v558 = vld [vmem:[#allocation2 + $0x3c] sm:$0xf]
  %v559 = vld [vmem:[#allocation2 + $0x40] sm:$0xf]
  %v560 = vld [vmem:[#allocation2 + $0x44] sm:$0xf]
  %v561 = vld [vmem:[#allocation2 + $0x48] sm:$0xf]
  %v562 = vld [vmem:[#allocation2 + $0x4c] sm:$0xf]
  %v563 = vld [vmem:[#allocation2 + $0x50] sm:$0xf]
  %v564 = vld [vmem:[#allocation2 + $0x54] sm:$0xf]
  %v565 = vld [vmem:[#allocation2 + $0x58] sm:$0xf]
  %v566 = vld [vmem:[#allocation2 + $0x5c] sm:$0xf]
  %v567 = vld [vmem:[#allocation2 + $0x60] sm:$0xf]
  %v568 = vld [vmem:[#allocation2 + $0x64] sm:$0xf]
  %v569 = vld [vmem:[#allocation2 + $0x68] sm:$0xf]
  %v570 = vld [vmem:[#allocation2 + $0x6c] sm:$0xf]
  %v571 = vld [vmem:[#allocation2 + $0x70] sm:$0xf]
  %v572 = vld [vmem:[#allocation2 + $0x74] sm:$0xf]
  %v573 = vld [vmem:[#allocation2 + $0x78] sm:$0xf]
  %v574 = vld [vmem:[#allocation2 + $0x7c] sm:$0xf]
  %v607 = vunpack.c.l.b16 %v543
  %v608 = vunpack.c.l.b16 %v544
  %v609 = vunpack.c.l.b16 %v545
  %v610 = vunpack.c.l.b16 %v546
  %v611 = vunpack.c.l.b16 %v547
  %v612 = vunpack.c.l.b16 %v548
  %v613 = vunpack.c.l.b16 %v549
  %v614 = vunpack.c.l.b16 %v550
  %v615 = vunpack.c.l.b16 %v551
  %v616 = vunpack.c.l.b16 %v552
  %v617 = vunpack.c.l.b16 %v553
  %v618 = vunpack.c.l.b16 %v554
  %v619 = vunpack.c.l.b16 %v555
  %v620 = vunpack.c.l.b16 %v556
  %v621 = vunpack.c.l.b16 %v557
  %v622 = vunpack.c.l.b16 %v558
  %v623 = vunpack.c.l.b16 %v559
  %v624 = vunpack.c.l.b16 %v560
  %v625 = vunpack.c.l.b16 %v561
  %v626 = vunpack.c.l.b16 %v562
  %v627 = vunpack.c.l.b16 %v563
  %v628 = vunpack.c.l.b16 %v564
  %v629 = vunpack.c.l.b16 %v565
  %v630 = vunpack.c.l.b16 %v566
  %v631 = vunpack.c.l.b16 %v567
  %v632 = vunpack.c.l.b16 %v568
  %v633 = vunpack.c.l.b16 %v569
  %v634 = vunpack.c.l.b16 %v570
  %v635 = vunpack.c.l.b16 %v571
  %v636 = vunpack.c.l.b16 %v572
  %v637 = vunpack.c.l.b16 %v573
  %v638 = vunpack.c.l.b16 %v574
  %v639 = vpack.c.b16 %v608, %v607
  %v640 = vpack.c.b16 %v610, %v609
  %v641 = vpack.c.b16 %v612, %v611
  %v642 = vpack.c.b16 %v614, %v613
  %v643 = vpack.c.b16 %v616, %v615
  %v644 = vpack.c.b16 %v618, %v617
  %v645 = vpack.c.b16 %v620, %v619
  %v646 = vpack.c.b16 %v622, %v621
  %v647 = vpack.c.b16 %v624, %v623
  %v648 = vpack.c.b16 %v626, %v625
  %v649 = vpack.c.b16 %v628, %v627
  %v650 = vpack.c.b16 %v630, %v629
  %v651 = vpack.c.b16 %v632, %v631
  %v652 = vpack.c.b16 %v634, %v633
  %v653 = vpack.c.b16 %v636, %v635
  %v654 = vpack.c.b16 %v638, %v637
  %671 = vmatpush.bf16.msra.mxu0 %v646
  %672 = vmatpush.bf16.msra.mxu0 %v645
  %673 = vmatpush.bf16.msra.mxu0 %v644
  %674 = vmatpush.bf16.msra.mxu0 %v643
  %675 = vmatpush.bf16.msra.mxu0 %v642
  %676 = vmatpush.bf16.msra.mxu0 %v641
  %677 = vmatpush.bf16.msra.mxu0 %v640
  %678 = vmatpush.bf16.msra.mxu0 %v639
  %679 = vmatmul.bf16.gmra.mxu0 %v511
  %v680 = vpop.f32.mrf.mxu0
  %v681 = vadd.f32 0.0, %v680
  %v682 = vpop.f32.mrf.mxu0
  %v683 = vadd.f32 0.0, %v682
  %684 = vmatmul.bf16.gmra.mxu0 %v513
  %v685 = vpop.f32.mrf.mxu0
  %v686 = vadd.f32 0.0, %v685
  %v687 = vpop.f32.mrf.mxu0
  %v688 = vadd.f32 0.0, %v687
  %689 = vmatmul.bf16.gmra.mxu0 %v515
  %v690 = vpop.f32.mrf.mxu0
  %v691 = vadd.f32 0.0, %v690
  %v692 = vpop.f32.mrf.mxu0
  %v693 = vadd.f32 0.0, %v692
  %694 = vmatmul.bf16.gmra.mxu0 %v517
  %v695 = vpop.f32.mrf.mxu0
  %v696 = vadd.f32 0.0, %v695
  %v697 = vpop.f32.mrf.mxu0
  %v698 = vadd.f32 0.0, %v697
  %699 = vmatmul.bf16.gmra.mxu0 %v519
  %v700 = vpop.f32.mrf.mxu0
  %v701 = vadd.f32 0.0, %v700
  %v702 = vpop.f32.mrf.mxu0
  %v703 = vadd.f32 0.0, %v702
  %704 = vmatmul.bf16.gmra.mxu0 %v521
  %v705 = vpop.f32.mrf.mxu0
  %v706 = vadd.f32 0.0, %v705
  %v707 = vpop.f32.mrf.mxu0
  %v708 = vadd.f32 0.0, %v707
  %709 = vmatmul.bf16.gmra.mxu0 %v523
  %v710 = vpop.f32.mrf.mxu0
  %v711 = vadd.f32 0.0, %v710
  %v712 = vpop.f32.mrf.mxu0
  %v713 = vadd.f32 0.0, %v712
  %714 = vmatmul.bf16.gmra.mxu0 %v525
  %v715 = vpop.f32.mrf.mxu0
  %v716 = vadd.f32 0.0, %v715
  %v717 = vpop.f32.mrf.mxu0
  %v718 = vadd.f32 0.0, %v717
  %719 = vmatmul.bf16.gmra.mxu0 %v527
  %v720 = vpop.f32.mrf.mxu0
  %v721 = vadd.f32 0.0, %v720
  %v722 = vpop.f32.mrf.mxu0
  %v723 = vadd.f32 0.0, %v722
  %724 = vmatmul.bf16.gmra.mxu0 %v529
  %v725 = vpop.f32.mrf.mxu0
  %v726 = vadd.f32 0.0, %v725
  %v727 = vpop.f32.mrf.mxu0
  %v728 = vadd.f32 0.0, %v727
  %729 = vmatmul.bf16.gmra.mxu0 %v531
  %v730 = vpop.f32.mrf.mxu0
  %v731 = vadd.f32 0.0, %v730
  %v732 = vpop.f32.mrf.mxu0
  %v733 = vadd.f32 0.0, %v732
  %734 = vmatmul.bf16.gmra.mxu0 %v533
  %v735 = vpop.f32.mrf.mxu0
  %v736 = vadd.f32 0.0, %v735
  %v737 = vpop.f32.mrf.mxu0
  %v738 = vadd.f32 0.0, %v737
  %739 = vmatmul.bf16.gmra.mxu0 %v535
  %v740 = vpop.f32.mrf.mxu0
  %v741 = vadd.f32 0.0, %v740
  %v742 = vpop.f32.mrf.mxu0
  %v743 = vadd.f32 0.0, %v742
  %744 = vmatmul.bf16.gmra.mxu0 %v537
  %v745 = vpop.f32.mrf.mxu0
  %v746 = vadd.f32 0.0, %v745
  %v747 = vpop.f32.mrf.mxu0
  %v748 = vadd.f32 0.0, %v747
  %749 = vmatmul.bf16.gmra.mxu0 %v539
  %v750 = vpop.f32.mrf.mxu0
  %v751 = vadd.f32 0.0, %v750
  %v752 = vpop.f32.mrf.mxu0
  %v753 = vadd.f32 0.0, %v752
  %754 = vmatmul.bf16.gmra.mxu0 %v541
  %v755 = vpop.f32.mrf.mxu0
  %v756 = vadd.f32 0.0, %v755
  %v757 = vpop.f32.mrf.mxu0
  %v758 = vadd.f32 0.0, %v757
  %759 = vdwg.mxu0
  %760 = vmatpush.bf16.msra.mxu0 %v654
  %761 = vmatpush.bf16.msra.mxu0 %v653
  %762 = vmatpush.bf16.msra.mxu0 %v652
  %763 = vmatpush.bf16.msra.mxu0 %v651
  %764 = vmatpush.bf16.msra.mxu0 %v650
  %765 = vmatpush.bf16.msra.mxu0 %v649
  %766 = vmatpush.bf16.msra.mxu0 %v648
  %767 = vmatpush.bf16.msra.mxu0 %v647
  %768 = vmatmul.bf16.gmra.mxu0 %v512
  %v769 = vpop.f32.mrf.mxu0
  %v770 = vadd.f32 %v681, %v769
  %v771 = vpop.f32.mrf.mxu0
  %v772 = vadd.f32 %v683, %v771
  %773 = vmatmul.bf16.gmra.mxu0 %v514
  %v774 = vpop.f32.mrf.mxu0
  %v775 = vadd.f32 %v686, %v774
  %v776 = vpop.f32.mrf.mxu0
  %v777 = vadd.f32 %v688, %v776
  %778 = vmatmul.bf16.gmra.mxu0 %v516
  %v779 = vpop.f32.mrf.mxu0
  %v780 = vadd.f32 %v691, %v779
  %v781 = vpop.f32.mrf.mxu0
  %v782 = vadd.f32 %v693, %v781
  %783 = vmatmul.bf16.gmra.mxu0 %v518
  %v784 = vpop.f32.mrf.mxu0
  %v785 = vadd.f32 %v696, %v784
  %v786 = vpop.f32.mrf.mxu0
  %v787 = vadd.f32 %v698, %v786
  %788 = vmatmul.bf16.gmra.mxu0 %v520
  %v789 = vpop.f32.mrf.mxu0
  %v790 = vadd.f32 %v701, %v789
  %v791 = vpop.f32.mrf.mxu0
  %v792 = vadd.f32 %v703, %v791
  %793 = vmatmul.bf16.gmra.mxu0 %v522
  %v794 = vpop.f32.mrf.mxu0
  %v795 = vadd.f32 %v706, %v794
  %v796 = vpop.f32.mrf.mxu0
  %v797 = vadd.f32 %v708, %v796
  %798 = vmatmul.bf16.gmra.mxu0 %v524
  %v799 = vpop.f32.mrf.mxu0
  %v800 = vadd.f32 %v711, %v799
  %v801 = vpop.f32.mrf.mxu0
  %v802 = vadd.f32 %v713, %v801
  %803 = vmatmul.bf16.gmra.mxu0 %v526
  %v804 = vpop.f32.mrf.mxu0
  %v805 = vadd.f32 %v716, %v804
  %v806 = vpop.f32.mrf.mxu0
  %v807 = vadd.f32 %v718, %v806
  %808 = vmatmul.bf16.gmra.mxu0 %v528
  %v809 = vpop.f32.mrf.mxu0
  %v810 = vadd.f32 %v721, %v809
  %v811 = vpop.f32.mrf.mxu0
  %v812 = vadd.f32 %v723, %v811
  %813 = vmatmul.bf16.gmra.mxu0 %v530
  %v814 = vpop.f32.mrf.mxu0
  %v815 = vadd.f32 %v726, %v814
  %v816 = vpop.f32.mrf.mxu0
  %v817 = vadd.f32 %v728, %v816
  %818 = vmatmul.bf16.gmra.mxu0 %v532
  %v819 = vpop.f32.mrf.mxu0
  %v820 = vadd.f32 %v731, %v819
  %v821 = vpop.f32.mrf.mxu0
  %v822 = vadd.f32 %v733, %v821
  %823 = vmatmul.bf16.gmra.mxu0 %v534
  %v824 = vpop.f32.mrf.mxu0
  %v825 = vadd.f32 %v736, %v824
  %v826 = vpop.f32.mrf.mxu0
  %v827 = vadd.f32 %v738, %v826
  %828 = vmatmul.bf16.gmra.mxu0 %v536
  %v829 = vpop.f32.mrf.mxu0
  %v830 = vadd.f32 %v741, %v829
  %v831 = vpop.f32.mrf.mxu0
  %v832 = vadd.f32 %v743, %v831
  %833 = vmatmul.bf16.gmra.mxu0 %v538
  %v834 = vpop.f32.mrf.mxu0
  %v835 = vadd.f32 %v746, %v834
  %v836 = vpop.f32.mrf.mxu0
  %v837 = vadd.f32 %v748, %v836
  %838 = vmatmul.bf16.gmra.mxu0 %v540
  %v839 = vpop.f32.mrf.mxu0
  %v840 = vadd.f32 %v751, %v839
  %v841 = vpop.f32.mrf.mxu0
  %v842 = vadd.f32 %v753, %v841
  %843 = vmatmul.bf16.gmra.mxu0 %v542
  %v844 = vpop.f32.mrf.mxu0
  %v845 = vadd.f32 %v756, %v844
  %v846 = vpop.f32.mrf.mxu0
  %v847 = vadd.f32 %v758, %v846
  %848 = vdwg.mxu0
  %v849 = vld [vmem:[%s5] sm:$0xff]
  %v850 = vld [vmem:[%s5 + $0x8] sm:$0xff]
  %v851 = vld [vmem:[%s5 + $0x10] sm:$0xff]
  %v852 = vld [vmem:[%s5 + $0x18] sm:$0xff]
  %v853 = vld [vmem:[%s5 + $0x20] sm:$0xff]
  %v854 = vld [vmem:[%s5 + $0x28] sm:$0xff]
  %v855 = vld [vmem:[%s5 + $0x30] sm:$0xff]
  %v856 = vld [vmem:[%s5 + $0x38] sm:$0xff]
  %v857 = vld [vmem:[%s5 + $0x40] sm:$0xff]
  %v858 = vld [vmem:[%s5 + $0x48] sm:$0xff]
  %v859 = vld [vmem:[%s5 + $0x50] sm:$0xff]
  %v860 = vld [vmem:[%s5 + $0x58] sm:$0xff]
  %v861 = vld [vmem:[%s5 + $0x60] sm:$0xff]
  %v862 = vld [vmem:[%s5 + $0x68] sm:$0xff]
  %v863 = vld [vmem:[%s5 + $0x70] sm:$0xff]
  %v864 = vld [vmem:[%s5 + $0x78] sm:$0xff]
  %v865 = vld [vmem:[%s5 + $0x80] sm:$0xff]
  %v866 = vld [vmem:[%s5 + $0x88] sm:$0xff]
  %v867 = vld [vmem:[%s5 + $0x90] sm:$0xff]
  %v868 = vld [vmem:[%s5 + $0x98] sm:$0xff]
  %v869 = vld [vmem:[%s5 + $0xa0] sm:$0xff]
  %v870 = vld [vmem:[%s5 + $0xa8] sm:$0xff]
  %v871 = vld [vmem:[%s5 + $0xb0] sm:$0xff]
  %v872 = vld [vmem:[%s5 + $0xb8] sm:$0xff]
  %v873 = vld [vmem:[%s5 + $0xc0] sm:$0xff]
  %v874 = vld [vmem:[%s5 + $0xc8] sm:$0xff]
  %v875 = vld [vmem:[%s5 + $0xd0] sm:$0xff]
  %v876 = vld [vmem:[%s5 + $0xd8] sm:$0xff]
  %v877 = vld [vmem:[%s5 + $0xe0] sm:$0xff]
  %v878 = vld [vmem:[%s5 + $0xe8] sm:$0xff]
  %v879 = vld [vmem:[%s5 + $0xf0] sm:$0xff]
  %v880 = vld [vmem:[%s5 + $0xf8] sm:$0xff]
  %882 = vset.pattern.permute.xlu0 0
  %883 = vperm.xlu0 %882, %v849
  %v884 = vpop.permute.xlu0 %883
  %887 = vset.pattern.permute.xlu0 0
  %888 = vperm.xlu0 %887, %v850
  %v889 = vpop.permute.xlu0 %888
  %892 = vset.pattern.permute.xlu0 0
  %893 = vperm.xlu0 %892, %v851
  %v894 = vpop.permute.xlu0 %893
  %897 = vset.pattern.permute.xlu0 0
  %898 = vperm.xlu0 %897, %v852
  %v899 = vpop.permute.xlu0 %898
  %902 = vset.pattern.permute.xlu0 0
  %903 = vperm.xlu0 %902, %v853
  %v904 = vpop.permute.xlu0 %903
  %907 = vset.pattern.permute.xlu0 0
  %908 = vperm.xlu0 %907, %v854
  %v909 = vpop.permute.xlu0 %908
  %912 = vset.pattern.permute.xlu0 0
  %913 = vperm.xlu0 %912, %v855
  %v914 = vpop.permute.xlu0 %913
  %917 = vset.pattern.permute.xlu0 0
  %918 = vperm.xlu0 %917, %v856
  %v919 = vpop.permute.xlu0 %918
  %922 = vset.pattern.permute.xlu0 0
  %923 = vperm.xlu0 %922, %v857
  %v924 = vpop.permute.xlu0 %923
  %927 = vset.pattern.permute.xlu0 0
  %928 = vperm.xlu0 %927, %v858
  %v929 = vpop.permute.xlu0 %928
  %932 = vset.pattern.permute.xlu0 0
  %933 = vperm.xlu0 %932, %v859
  %v934 = vpop.permute.xlu0 %933
  %937 = vset.pattern.permute.xlu0 0
  %938 = vperm.xlu0 %937, %v860
  %v939 = vpop.permute.xlu0 %938
  %942 = vset.pattern.permute.xlu0 0
  %943 = vperm.xlu0 %942, %v861
  %v944 = vpop.permute.xlu0 %943
  %947 = vset.pattern.permute.xlu0 0
  %948 = vperm.xlu0 %947, %v862
  %v949 = vpop.permute.xlu0 %948
  %952 = vset.pattern.permute.xlu0 0
  %953 = vperm.xlu0 %952, %v863
  %v954 = vpop.permute.xlu0 %953
  %957 = vset.pattern.permute.xlu0 0
  %958 = vperm.xlu0 %957, %v864
  %v959 = vpop.permute.xlu0 %958
  %962 = vset.pattern.permute.xlu0 0
  %963 = vperm.xlu0 %962, %v865
  %v964 = vpop.permute.xlu0 %963
  %967 = vset.pattern.permute.xlu0 0
  %968 = vperm.xlu0 %967, %v866
  %v969 = vpop.permute.xlu0 %968
  %972 = vset.pattern.permute.xlu0 0
  %973 = vperm.xlu0 %972, %v867
  %v974 = vpop.permute.xlu0 %973
  %977 = vset.pattern.permute.xlu0 0
  %978 = vperm.xlu0 %977, %v868
  %v979 = vpop.permute.xlu0 %978
  %982 = vset.pattern.permute.xlu0 0
  %983 = vperm.xlu0 %982, %v869
  %v984 = vpop.permute.xlu0 %983
  %987 = vset.pattern.permute.xlu0 0
  %988 = vperm.xlu0 %987, %v870
  %v989 = vpop.permute.xlu0 %988
  %992 = vset.pattern.permute.xlu0 0
  %993 = vperm.xlu0 %992, %v871
  %v994 = vpop.permute.xlu0 %993
  %997 = vset.pattern.permute.xlu0 0
  %998 = vperm.xlu0 %997, %v872
  %v999 = vpop.permute.xlu0 %998
  %1002 = vset.pattern.permute.xlu0 0
  %1003 = vperm.xlu0 %1002, %v873
  %v1004 = vpop.permute.xlu0 %1003
  %1007 = vset.pattern.permute.xlu0 0
  %1008 = vperm.xlu0 %1007, %v874
  %v1009 = vpop.permute.xlu0 %1008
  %1012 = vset.pattern.permute.xlu0 0
  %1013 = vperm.xlu0 %1012, %v875
  %v1014 = vpop.permute.xlu0 %1013
  %1017 = vset.pattern.permute.xlu0 0
  %1018 = vperm.xlu0 %1017, %v876
  %v1019 = vpop.permute.xlu0 %1018
  %1022 = vset.pattern.permute.xlu0 0
  %1023 = vperm.xlu0 %1022, %v877
  %v1024 = vpop.permute.xlu0 %1023
  %1027 = vset.pattern.permute.xlu0 0
  %1028 = vperm.xlu0 %1027, %v878
  %v1029 = vpop.permute.xlu0 %1028
  %1032 = vset.pattern.permute.xlu0 0
  %1033 = vperm.xlu0 %1032, %v879
  %v1034 = vpop.permute.xlu0 %1033
  %1037 = vset.pattern.permute.xlu0 0
  %1038 = vperm.xlu0 %1037, %v880
  %v1039 = vpop.permute.xlu0 %1038
  %v1041 = vmul.f32 %v884, %v770
  %v1042 = vmul.f32 %v889, %v772
  %v1043 = vmul.f32 %v894, %v775
  %v1044 = vmul.f32 %v899, %v777
  %v1045 = vmul.f32 %v904, %v780
  %v1046 = vmul.f32 %v909, %v782
  %v1047 = vmul.f32 %v914, %v785
  %v1048 = vmul.f32 %v919, %v787
  %v1049 = vmul.f32 %v924, %v790
  %v1050 = vmul.f32 %v929, %v792
  %v1051 = vmul.f32 %v934, %v795
  %v1052 = vmul.f32 %v939, %v797
  %v1053 = vmul.f32 %v944, %v800
  %v1054 = vmul.f32 %v949, %v802
  %v1055 = vmul.f32 %v954, %v805
  %v1056 = vmul.f32 %v959, %v807
  %v1057 = vmul.f32 %v964, %v810
  %v1058 = vmul.f32 %v969, %v812
  %v1059 = vmul.f32 %v974, %v815
  %v1060 = vmul.f32 %v979, %v817
  %v1061 = vmul.f32 %v984, %v820
  %v1062 = vmul.f32 %v989, %v822
  %v1063 = vmul.f32 %v994, %v825
  %v1064 = vmul.f32 %v999, %v827
  %v1065 = vmul.f32 %v1004, %v830
  %v1066 = vmul.f32 %v1009, %v832
  %v1067 = vmul.f32 %v1014, %v835
  %v1068 = vmul.f32 %v1019, %v837
  %v1069 = vmul.f32 %v1024, %v840
  %v1070 = vmul.f32 %v1029, %v842
  %v1071 = vmul.f32 %v1034, %v845
  %v1072 = vmul.f32 %v1039, %v847
  %v1073 = vld [vmem:[%s3] sm:$0x1]
  %v1075 = vperm.slane %v1073, 0
  %v1077 = vadd.f32 %v1041, %v1075
  %v1078 = vadd.f32 %v1042, %v1075
  %v1079 = vadd.f32 %v1043, %v1075
  %v1080 = vadd.f32 %v1044, %v1075
  %v1081 = vadd.f32 %v1045, %v1075
  %v1082 = vadd.f32 %v1046, %v1075
  %v1083 = vadd.f32 %v1047, %v1075
  %v1084 = vadd.f32 %v1048, %v1075
  %v1085 = vadd.f32 %v1049, %v1075
  %v1086 = vadd.f32 %v1050, %v1075
  %v1087 = vadd.f32 %v1051, %v1075
  %v1088 = vadd.f32 %v1052, %v1075
  %v1089 = vadd.f32 %v1053, %v1075
  %v1090 = vadd.f32 %v1054, %v1075
  %v1091 = vadd.f32 %v1055, %v1075
  %v1092 = vadd.f32 %v1056, %v1075
  %v1093 = vadd.f32 %v1057, %v1075
  %v1094 = vadd.f32 %v1058, %v1075
  %v1095 = vadd.f32 %v1059, %v1075
  %v1096 = vadd.f32 %v1060, %v1075
  %v1097 = vadd.f32 %v1061, %v1075
  %v1098 = vadd.f32 %v1062, %v1075
  %v1099 = vadd.f32 %v1063, %v1075
  %v1100 = vadd.f32 %v1064, %v1075
  %v1101 = vadd.f32 %v1065, %v1075
  %v1102 = vadd.f32 %v1066, %v1075
  %v1103 = vadd.f32 %v1067, %v1075
  %v1104 = vadd.f32 %v1068, %v1075
  %v1105 = vadd.f32 %v1069, %v1075
  %v1106 = vadd.f32 %v1070, %v1075
  %v1107 = vadd.f32 %v1071, %v1075
  %v1108 = vadd.f32 %v1072, %v1075
  %v1109 = vmax.f32 %v1077, 0.0
  %v1110 = vmax.f32 %v1078, 0.0
  %v1111 = vmax.f32 %v1079, 0.0
  %v1112 = vmax.f32 %v1080, 0.0
  %v1113 = vmax.f32 %v1081, 0.0
  %v1114 = vmax.f32 %v1082, 0.0
  %v1115 = vmax.f32 %v1083, 0.0
  %v1116 = vmax.f32 %v1084, 0.0
  %v1117 = vmax.f32 %v1085, 0.0
  %v1118 = vmax.f32 %v1086, 0.0
  %v1119 = vmax.f32 %v1087, 0.0
  %v1120 = vmax.f32 %v1088, 0.0
  %v1121 = vmax.f32 %v1089, 0.0
  %v1122 = vmax.f32 %v1090, 0.0
  %v1123 = vmax.f32 %v1091, 0.0
  %v1124 = vmax.f32 %v1092, 0.0
  %v1125 = vmax.f32 %v1093, 0.0
  %v1126 = vmax.f32 %v1094, 0.0
  %v1127 = vmax.f32 %v1095, 0.0
  %v1128 = vmax.f32 %v1096, 0.0
  %v1129 = vmax.f32 %v1097, 0.0
  %v1130 = vmax.f32 %v1098, 0.0
  %v1131 = vmax.f32 %v1099, 0.0
  %v1132 = vmax.f32 %v1100, 0.0
  %v1133 = vmax.f32 %v1101, 0.0
  %v1134 = vmax.f32 %v1102, 0.0
  %v1135 = vmax.f32 %v1103, 0.0
  %v1136 = vmax.f32 %v1104, 0.0
  %v1137 = vmax.f32 %v1105, 0.0
  %v1138 = vmax.f32 %v1106, 0.0
  %v1139 = vmax.f32 %v1107, 0.0
  %v1140 = vmax.f32 %v1108, 0.0
  %v1141 = vpack.c.bf16 %v1110, %v1109
  %v1142 = vpack.c.bf16 %v1112, %v1111
  %v1143 = vpack.c.bf16 %v1114, %v1113
  %v1144 = vpack.c.bf16 %v1116, %v1115
  %v1145 = vpack.c.bf16 %v1118, %v1117
  %v1146 = vpack.c.bf16 %v1120, %v1119
  %v1147 = vpack.c.bf16 %v1122, %v1121
  %v1148 = vpack.c.bf16 %v1124, %v1123
  %v1149 = vpack.c.bf16 %v1126, %v1125
  %v1150 = vpack.c.bf16 %v1128, %v1127
  %v1151 = vpack.c.bf16 %v1130, %v1129
  %v1152 = vpack.c.bf16 %v1132, %v1131
  %v1153 = vpack.c.bf16 %v1134, %v1133
  %v1154 = vpack.c.bf16 %v1136, %v1135
  %v1155 = vpack.c.bf16 %v1138, %v1137
  %v1156 = vpack.c.bf16 %v1140, %v1139
  %v1157 = vld [vmem:[%s4] sm:$0xf]
  %v1158 = vld [vmem:[%s4 + $0x4] sm:$0xf]
  %v1159 = vld [vmem:[%s4 + $0x8] sm:$0xf]
  %v1160 = vld [vmem:[%s4 + $0xc] sm:$0xf]
  %v1161 = vld [vmem:[%s4 + $0x10] sm:$0xf]
  %v1162 = vld [vmem:[%s4 + $0x14] sm:$0xf]
  %v1163 = vld [vmem:[%s4 + $0x18] sm:$0xf]
  %v1164 = vld [vmem:[%s4 + $0x1c] sm:$0xf]
  %v1173 = vunpack.c.l.b16 %v1157
  %v1174 = vunpack.c.l.b16 %v1158
  %v1175 = vunpack.c.l.b16 %v1159
  %v1176 = vunpack.c.l.b16 %v1160
  %v1177 = vunpack.c.l.b16 %v1161
  %v1178 = vunpack.c.l.b16 %v1162
  %v1179 = vunpack.c.l.b16 %v1163
  %v1180 = vunpack.c.l.b16 %v1164
  %v1181 = vpack.c.b16 %v1174, %v1173
  %v1182 = vpack.c.b16 %v1176, %v1175
  %v1183 = vpack.c.b16 %v1178, %v1177
  %v1184 = vpack.c.b16 %v1180, %v1179
  %vm1189 = vcmask 523264
  %v1191 = vsel %vm1189, %v1141, 0
  %v1194 = vsel %vm1189, %v1142, 0
  %v1197 = vsel %vm1189, %v1143, 0
  %v1200 = vsel %vm1189, %v1144, 0
  %v1203 = vsel %vm1189, %v1145, 0
  %v1206 = vsel %vm1189, %v1146, 0
  %v1209 = vsel %vm1189, %v1147, 0
  %v1212 = vsel %vm1189, %v1148, 0
  %v1215 = vsel %vm1189, %v1149, 0
  %v1218 = vsel %vm1189, %v1150, 0
  %v1221 = vsel %vm1189, %v1151, 0
  %v1224 = vsel %vm1189, %v1152, 0
  %v1227 = vsel %vm1189, %v1153, 0
  %v1230 = vsel %vm1189, %v1154, 0
  %v1233 = vsel %vm1189, %v1155, 0
  %v1236 = vsel %vm1189, %v1156, 0
  %1238 = vmatpush.bf16.msra.mxu0 0
  %1239 = vmatpush.bf16.msra.mxu0 0
  %1240 = vmatpush.bf16.msra.mxu0 0
  %1241 = vmatpush.bf16.msra.mxu0 0
  %1242 = vmatpush.bf16.msra.mxu0 %v1184
  %1243 = vmatpush.bf16.msra.mxu0 %v1183
  %1244 = vmatpush.bf16.msra.mxu0 %v1182
  %1245 = vmatpush.bf16.msra.mxu0 %v1181
  %1246 = vmatmul.bf16.gmra.mxu0 %v1191
  %v1247 = vpop.f32.mrf.mxu0
  %v1248 = vadd.f32 0.0, %v1247
  %v1249 = vpop.f32.mrf.mxu0
  %v1250 = vadd.f32 0.0, %v1249
  %1251 = vmatmul.bf16.gmra.mxu0 %v1194
  %v1252 = vpop.f32.mrf.mxu0
  %v1253 = vadd.f32 0.0, %v1252
  %v1254 = vpop.f32.mrf.mxu0
  %v1255 = vadd.f32 0.0, %v1254
  %1256 = vmatmul.bf16.gmra.mxu0 %v1197
  %v1257 = vpop.f32.mrf.mxu0
  %v1258 = vadd.f32 0.0, %v1257
  %v1259 = vpop.f32.mrf.mxu0
  %v1260 = vadd.f32 0.0, %v1259
  %1261 = vmatmul.bf16.gmra.mxu0 %v1200
  %v1262 = vpop.f32.mrf.mxu0
  %v1263 = vadd.f32 0.0, %v1262
  %v1264 = vpop.f32.mrf.mxu0
  %v1265 = vadd.f32 0.0, %v1264
  %1266 = vmatmul.bf16.gmra.mxu0 %v1203
  %v1267 = vpop.f32.mrf.mxu0
  %v1268 = vadd.f32 0.0, %v1267
  %v1269 = vpop.f32.mrf.mxu0
  %v1270 = vadd.f32 0.0, %v1269
  %1271 = vmatmul.bf16.gmra.mxu0 %v1206
  %v1272 = vpop.f32.mrf.mxu0
  %v1273 = vadd.f32 0.0, %v1272
  %v1274 = vpop.f32.mrf.mxu0
  %v1275 = vadd.f32 0.0, %v1274
  %1276 = vmatmul.bf16.gmra.mxu0 %v1209
  %v1277 = vpop.f32.mrf.mxu0
  %v1278 = vadd.f32 0.0, %v1277
  %v1279 = vpop.f32.mrf.mxu0
  %v1280 = vadd.f32 0.0, %v1279
  %1281 = vmatmul.bf16.gmra.mxu0 %v1212
  %v1282 = vpop.f32.mrf.mxu0
  %v1283 = vadd.f32 0.0, %v1282
  %v1284 = vpop.f32.mrf.mxu0
  %v1285 = vadd.f32 0.0, %v1284
  %1286 = vmatmul.bf16.gmra.mxu0 %v1215
  %v1287 = vpop.f32.mrf.mxu0
  %v1288 = vadd.f32 0.0, %v1287
  %v1289 = vpop.f32.mrf.mxu0
  %v1290 = vadd.f32 0.0, %v1289
  %1291 = vmatmul.bf16.gmra.mxu0 %v1218
  %v1292 = vpop.f32.mrf.mxu0
  %v1293 = vadd.f32 0.0, %v1292
  %v1294 = vpop.f32.mrf.mxu0
  %v1295 = vadd.f32 0.0, %v1294
  %1296 = vmatmul.bf16.gmra.mxu0 %v1221
  %v1297 = vpop.f32.mrf.mxu0
  %v1298 = vadd.f32 0.0, %v1297
  %v1299 = vpop.f32.mrf.mxu0
  %v1300 = vadd.f32 0.0, %v1299
  %1301 = vmatmul.bf16.gmra.mxu0 %v1224
  %v1302 = vpop.f32.mrf.mxu0
  %v1303 = vadd.f32 0.0, %v1302
  %v1304 = vpop.f32.mrf.mxu0
  %v1305 = vadd.f32 0.0, %v1304
  %1306 = vmatmul.bf16.gmra.mxu0 %v1227
  %v1307 = vpop.f32.mrf.mxu0
  %v1308 = vadd.f32 0.0, %v1307
  %v1309 = vpop.f32.mrf.mxu0
  %v1310 = vadd.f32 0.0, %v1309
  %1311 = vmatmul.bf16.gmra.mxu0 %v1230
  %v1312 = vpop.f32.mrf.mxu0
  %v1313 = vadd.f32 0.0, %v1312
  %v1314 = vpop.f32.mrf.mxu0
  %v1315 = vadd.f32 0.0, %v1314
  %1316 = vmatmul.bf16.gmra.mxu0 %v1233
  %v1317 = vpop.f32.mrf.mxu0
  %v1318 = vadd.f32 0.0, %v1317
  %v1319 = vpop.f32.mrf.mxu0
  %v1320 = vadd.f32 0.0, %v1319
  %1321 = vmatmul.bf16.gmra.mxu0 %v1236
  %v1322 = vpop.f32.mrf.mxu0
  %v1323 = vadd.f32 0.0, %v1322
  %v1324 = vpop.f32.mrf.mxu0
  %v1325 = vadd.f32 0.0, %v1324
  %1326 = vdwg.mxu0
  %v1327 = vmul.f32 %v884, %v1248
  %v1328 = vmul.f32 %v889, %v1250
  %v1329 = vmul.f32 %v894, %v1253
  %v1330 = vmul.f32 %v899, %v1255
  %v1331 = vmul.f32 %v904, %v1258
  %v1332 = vmul.f32 %v909, %v1260
  %v1333 = vmul.f32 %v914, %v1263
  %v1334 = vmul.f32 %v919, %v1265
  %v1335 = vmul.f32 %v924, %v1268
  %v1336 = vmul.f32 %v929, %v1270
  %v1337 = vmul.f32 %v934, %v1273
  %v1338 = vmul.f32 %v939, %v1275
  %v1339 = vmul.f32 %v944, %v1278
  %v1340 = vmul.f32 %v949, %v1280
  %v1341 = vmul.f32 %v954, %v1283
  %v1342 = vmul.f32 %v959, %v1285
  %v1343 = vmul.f32 %v964, %v1288
  %v1344 = vmul.f32 %v969, %v1290
  %v1345 = vmul.f32 %v974, %v1293
  %v1346 = vmul.f32 %v979, %v1295
  %v1347 = vmul.f32 %v984, %v1298
  %v1348 = vmul.f32 %v989, %v1300
  %v1349 = vmul.f32 %v994, %v1303
  %v1350 = vmul.f32 %v999, %v1305
  %v1351 = vmul.f32 %v1004, %v1308
  %v1352 = vmul.f32 %v1009, %v1310
  %v1353 = vmul.f32 %v1014, %v1313
  %v1354 = vmul.f32 %v1019, %v1315
  %v1355 = vmul.f32 %v1024, %v1318
  %v1356 = vmul.f32 %v1029, %v1320
  %v1357 = vmul.f32 %v1034, %v1323
  %v1358 = vmul.f32 %v1039, %v1325
  %v1359 = vpack.c.bf16 %v1327, %v1327
  %v1360 = vpack.c.bf16 %v1328, %v1328
  %v1361 = vpack.c.bf16 %v1329, %v1329
  %v1362 = vpack.c.bf16 %v1330, %v1330
  %v1363 = vpack.c.bf16 %v1331, %v1331
  %v1364 = vpack.c.bf16 %v1332, %v1332
  %v1365 = vpack.c.bf16 %v1333, %v1333
  %v1366 = vpack.c.bf16 %v1334, %v1334
  %v1367 = vpack.c.bf16 %v1335, %v1335
  %v1368 = vpack.c.bf16 %v1336, %v1336
  %v1369 = vpack.c.bf16 %v1337, %v1337
  %v1370 = vpack.c.bf16 %v1338, %v1338
  %v1371 = vpack.c.bf16 %v1339, %v1339
  %v1372 = vpack.c.bf16 %v1340, %v1340
  %v1373 = vpack.c.bf16 %v1341, %v1341
  %v1374 = vpack.c.bf16 %v1342, %v1342
  %v1375 = vpack.c.bf16 %v1343, %v1343
  %v1376 = vpack.c.bf16 %v1344, %v1344
  %v1377 = vpack.c.bf16 %v1345, %v1345
  %v1378 = vpack.c.bf16 %v1346, %v1346
  %v1379 = vpack.c.bf16 %v1347, %v1347
  %v1380 = vpack.c.bf16 %v1348, %v1348
  %v1381 = vpack.c.bf16 %v1349, %v1349
  %v1382 = vpack.c.bf16 %v1350, %v1350
  %v1383 = vpack.c.bf16 %v1351, %v1351
  %v1384 = vpack.c.bf16 %v1352, %v1352
  %v1385 = vpack.c.bf16 %v1353, %v1353
  %v1386 = vpack.c.bf16 %v1354, %v1354
  %v1387 = vpack.c.bf16 %v1355, %v1355
  %v1388 = vpack.c.bf16 %v1356, %v1356
  %v1389 = vpack.c.bf16 %v1357, %v1357
  %v1390 = vpack.c.bf16 %v1358, %v1358
  %1391 = vst [vmem:[%s6] sm:$0xf] %v1359
  %1392 = vst [vmem:[%s6 + $0x4] sm:$0xf] %v1360
  %1393 = vst [vmem:[%s6 + $0x8] sm:$0xf] %v1361
  %1394 = vst [vmem:[%s6 + $0xc] sm:$0xf] %v1362
  %1395 = vst [vmem:[%s6 + $0x10] sm:$0xf] %v1363
  %1396 = vst [vmem:[%s6 + $0x14] sm:$0xf] %v1364
  %1397 = vst [vmem:[%s6 + $0x18] sm:$0xf] %v1365
  %1398 = vst [vmem:[%s6 + $0x1c] sm:$0xf] %v1366
  %1399 = vst [vmem:[%s6 + $0x20] sm:$0xf] %v1367
  %1400 = vst [vmem:[%s6 + $0x24] sm:$0xf] %v1368
  %1401 = vst [vmem:[%s6 + $0x28] sm:$0xf] %v1369
  %1402 = vst [vmem:[%s6 + $0x2c] sm:$0xf] %v1370
  %1403 = vst [vmem:[%s6 + $0x30] sm:$0xf] %v1371
  %1404 = vst [vmem:[%s6 + $0x34] sm:$0xf] %v1372
  %1405 = vst [vmem:[%s6 + $0x38] sm:$0xf] %v1373
  %1406 = vst [vmem:[%s6 + $0x3c] sm:$0xf] %v1374
  %1407 = vst [vmem:[%s6 + $0x40] sm:$0xf] %v1375
  %1408 = vst [vmem:[%s6 + $0x44] sm:$0xf] %v1376
  %1409 = vst [vmem:[%s6 + $0x48] sm:$0xf] %v1377
  %1410 = vst [vmem:[%s6 + $0x4c] sm:$0xf] %v1378
  %1411 = vst [vmem:[%s6 + $0x50] sm:$0xf] %v1379
  %1412 = vst [vmem:[%s6 + $0x54] sm:$0xf] %v1380
  %1413 = vst [vmem:[%s6 + $0x58] sm:$0xf] %v1381
  %1414 = vst [vmem:[%s6 + $0x5c] sm:$0xf] %v1382
  %1415 = vst [vmem:[%s6 + $0x60] sm:$0xf] %v1383
  %1416 = vst [vmem:[%s6 + $0x64] sm:$0xf] %v1384
  %1417 = vst [vmem:[%s6 + $0x68] sm:$0xf] %v1385
  %1418 = vst [vmem:[%s6 + $0x6c] sm:$0xf] %v1386
  %1419 = vst [vmem:[%s6 + $0x70] sm:$0xf] %v1387
  %1420 = vst [vmem:[%s6 + $0x74] sm:$0xf] %v1388
  %1421 = vst [vmem:[%s6 + $0x78] sm:$0xf] %v1389
  %1422 = vst [vmem:[%s6 + $0x7c] sm:$0xf] %v1390
  // Predicated region
  $region30: #{gcn_forward.2} parent=0 // pred_check
    _
  $region31: #{gcn_forward.2} parent=0 // pred_check_branch
    %1424 = sbr.rel (0) target = $region33
  $region32: #{gcn_forward.2} parent=0 // pred_region
    _
  $region33: #{gcn_forward.2} parent=0 // pred_fallthru
    _
  // Predicated region
  $region34: #{gcn_forward.2} parent=0 // pred_check
    _
  $region35: #{gcn_forward.2} parent=0 // pred_check_branch
    %1426 = sbr.rel (0) target = $region37
  $region36: #{gcn_forward.2} parent=0 // pred_region
    _
  $region37: #{gcn_forward.2} parent=0 // pred_fallthru
    _

</llo_original>
